<compile_context>
chip_gen: v7x
topology: tpu7x:2x2x1
jax: 0.10.0
libtpu: 0.0.40
codegen_flags: <defaults>
</compile_context>

<pallas_src>
import functools

import jax
import jax.numpy as jnp
from jax.experimental import pallas as pl
from jax.experimental.pallas import tpu as pltpu

K = 3           # TAGConv default number of hops
F_PAD = 128     # lane-dense padded feature width (all layer widths here are <= 128)
SUBLANE = 8     # f32 sublane multiple for the node axis


def _round_up(x, m):
    return (x + m - 1) // m * m


# ----------------------------- fused Pallas kernel ------------------------------

def _ptag_kernel(a_ref, x_ref, w_ref, b_ref, o_ref, h_ref, hcat_ref, *, num_layers):
    # a_ref:    (Np, Np)            bf16  normalized adjacency (zero padded)
    # x_ref:    (Np, F_PAD)         f32   node features (zero padded)
    # w_ref:    (L, (K+1)*F_PAD, F_PAD) bf16  per-layer hop-flattened weights (zero padded)
    # b_ref:    (L, 1, F_PAD)       f32   per-layer bias (zero padded)
    # o_ref:    (Np, F_PAD)         f32   output
    # h_ref:    (Np, F_PAD)         f32   VMEM scratch: current layer input
    # hcat_ref: (Np, (K+1)*F_PAD)   bf16  VMEM scratch: [H, A H, A^2 H, A^3 H]
    f = x_ref.shape[1]
    a = a_ref[...]                                      # bf16, resident for all layers
    h_ref[...] = x_ref[...]

    for l in range(num_layers):                         # static unroll over layers
        hk = h_ref[...]                                 # f32
        hcat_ref[:, 0:f] = hk.astype(hcat_ref.dtype)    # hop 0
        for k in range(1, K + 1):
            # propagation on the MXU: bf16 x bf16 -> f32 accumulation
            hk = jnp.dot(a, hk.astype(a.dtype), preferred_element_type=jnp.float32)
            hcat_ref[:, k * f:(k + 1) * f] = hk.astype(hcat_ref.dtype)

        # one lane-dense matmul over all concatenated hops:
        #   (Np, (K+1)*F_PAD) @ ((K+1)*F_PAD, F_PAD)
        acc = jnp.dot(hcat_ref[...], w_ref[l], preferred_element_type=jnp.float32)
        acc = acc + b_ref[l]                            # f32 bias + activation (v5e-safe)

        if l == num_layers - 1:
            o_ref[...] = jnp.tanh(acc).astype(o_ref.dtype)
        else:
            h_ref[...] = jnp.maximum(acc, 0.0)


# ------------------------------ wrapper / padding -------------------------------

def _pad_inputs(x, a_hat, params):
    """Zero-pad nodes to a sublane multiple and features to F_PAD lanes."""
    n, f_in0 = x.shape
    n_pad = _round_up(n, SUBLANE)

    x_p = jnp.zeros((n_pad, F_PAD), jnp.float32).at[:n, :f_in0].set(x)
    a_p = jnp.zeros((n_pad, n_pad), jnp.float32).at[:n, :n].set(a_hat)
    a_p = a_p.astype(jnp.bfloat16)

    w_all, b_all = [], []
    for w, b in params:
        f_in, f_out = w.shape[1], w.shape[2]
        w_pad = jnp.zeros(((K + 1) * F_PAD, F_PAD), jnp.float32)
        for k in range(K + 1):
            w_pad = w_pad.at[k * F_PAD:k * F_PAD + f_in, :f_out].set(w[k])
        w_all.append(w_pad)
        b_all.append(jnp.zeros((F_PAD,), jnp.float32).at[:f_out].set(b))
    w_all = jnp.stack(w_all).astype(jnp.bfloat16)   # (L, (K+1)*F_PAD, F_PAD)
    b_all = jnp.stack(b_all)[:, None, :]            # (L, 1, F_PAD)
    return n_pad, x_p, a_p, w_all, b_all


def ptag_forward(x, a_hat, params):
    """Fused PTAG forward pass: one pallas_call for all TAGConv layers."""
    # TODO(synk): nn.Dropout is identity in eval mode; training-mode dropout not modeled.
    n = x.shape[0]
    num_layers = len(params)
    f_out_last = params[-1][0].shape[-1]
    n_pad, x_p, a_p, w_all, b_all = _pad_inputs(x, a_hat, params)

    # Whole-problem residency: A(bf16) + X + weights + scratches << VMEM on v5e/v6e/v7x,
    # so no grid is needed at these sizes (dense A caps N at a few thousand nodes).
    kernel = functools.partial(_ptag_kernel, num_layers=num_layers)
    out = pl.pallas_call(
        kernel,
        out_shape=jax.ShapeDtypeStruct((n_pad, F_PAD), jnp.float32),
        in_specs=[pl.BlockSpec(memory_space=pltpu.MemorySpace.VMEM)] * 4,
        out_specs=pl.BlockSpec(memory_space=pltpu.MemorySpace.VMEM),
        scratch_shapes=[
            pltpu.VMEM((n_pad, F_PAD), jnp.float32),                # H (layer input)
            pltpu.VMEM((n_pad, (K + 1) * F_PAD), jnp.bfloat16),     # H_cat
        ],
    )(a_p, x_p, w_all, b_all)
    return out[:n, :f_out_last]


def ptag_reference(x, a_hat, params):
    """Pure-JAX reference mirroring the kernel math (same padding / bf16 casts)."""
    n = x.shape[0]
    num_layers = len(params)
    f_out_last = params[-1][0].shape[-1]
    _, x_p, a_p, w_all, b_all = _pad_inputs(x, a_hat, params)

    h = x_p
    for l in range(num_layers):
        hk = h
        hops = [hk.astype(jnp.bfloat16)]
        for _ in range(K):
            hk = jnp.dot(a_p, hk.astype(jnp.bfloat16), preferred_element_type=jnp.float32)
            hops.append(hk.astype(jnp.bfloat16))
        hcat = jnp.concatenate(hops, axis=1)
        acc = jnp.dot(hcat, w_all[l], preferred_element_type=jnp.float32) + b_all[l, 0]
        h = jnp.tanh(acc) if l == num_layers - 1 else jnp.maximum(acc, 0.0)
    return h[:n, :f_out_last]


# ---------------- glue (plain JAX): graph normalization, params ----------------

def normalized_adjacency(edge_index, num_nodes):
    """Dense gcn_norm without self loops: A_hat = D^-1/2 A D^-1/2 (duplicate edges deduped)."""
    src, dst = edge_index
    a = jnp.zeros((num_nodes, num_nodes), jnp.float32).at[src, dst].set(1.0)
    deg = a.sum(axis=1)
    dinv = jnp.where(deg > 0, 1.0 / jnp.sqrt(deg), 0.0)
    return a * dinv[:, None] * dinv[None, :]


def init_tagconv_params(key, f_in, f_out):
    kw, kb = jax.random.split(key)
    w = jax.random.normal(kw, (K + 1, f_in, f_out), jnp.float32)
    w = w * (1.0 / jnp.sqrt(float(f_in * (K + 1))))
    b = jax.random.normal(kb, (f_out,), jnp.float32) * 0.01
    return w, b


if __name__ == "__main__":
    key = jax.random.PRNGKey(0)

    # Small synthetic graph / model config
    N = 16                 # number of nodes
    num_features = 8
    num_hidden = [32, 32]
    n_classes = 4
    gnn_layers = 3         # gnn_input + 1 hidden + gnn_output

    k_x, k_e1, k_e2, k_p = jax.random.split(key, 4)

    x = jax.random.normal(k_x, (N, num_features), jnp.float32)

    # random undirected edge_index (2, E)
    num_edges = 40
    src = jax.random.randint(k_e1, (num_edges,), 0, N)
    dst = jax.random.randint(k_e2, (num_edges,), 0, N)
    edge_index = jnp.stack(
        [jnp.concatenate([src, dst]), jnp.concatenate([dst, src])], axis=0
    )
    a_hat = normalized_adjacency(edge_index, N)

    # layer dims mirror PTAG.__init__
    layer_dims = [(num_features, num_hidden[0])]
    for l in range(1, gnn_layers - 1):
        layer_dims.append((num_hidden[l - 1], num_hidden[l]))
    layer_dims.append((num_hidden[-2], n_classes))

    keys = jax.random.split(k_p, len(layer_dims))
    params = [init_tagconv_params(kk, fi, fo) for kk, (fi, fo) in zip(keys, layer_dims)]

    out = ptag_forward(x, a_hat, params)
    out = jax.block_until_ready(out)
    ref = jax.block_until_ready(ptag_reference(x, a_hat, params))

    assert out.shape == (N, n_classes), out.shape
    assert jnp.all(jnp.isfinite(out))
    assert jnp.all(jnp.abs(out) <= 1.0 + 1e-6)        # tanh output range
    assert jnp.max(jnp.abs(out - ref)) < 2e-2, float(jnp.max(jnp.abs(out - ref)))
    print("KERNEL_OK")
</pallas_src>

<mosaic_0001>
module attributes {stable_mosaic.version = 11 : i64} {
  func.func @_ptag_kernel(%arg0: memref<16x16xbf16, #tpu.memory_space<vmem>>, %arg1: memref<16x128xf32, #tpu.memory_space<vmem>>, %arg2: memref<3x512x128xbf16, #tpu.memory_space<vmem>>, %arg3: memref<3x1x128xf32, #tpu.memory_space<vmem>>, %arg4: memref<16x128xf32, #tpu.memory_space<vmem>>, %arg5: memref<16x128xf32, #tpu.memory_space<vmem>>, %arg6: memref<16x512xbf16, #tpu.memory_space<vmem>>) attributes {dimension_semantics = [], scalar_prefetch = 0 : i64, scratch_operands = 2 : i64, tpu.core_type = #tpu.core_type<tc>} {
    %c0 = arith.constant 0 : index
    %c0_0 = arith.constant 0 : index
    %0 = vector.load %arg0[%c0, %c0_0] : memref<16x16xbf16, #tpu.memory_space<vmem>>, vector<16x16xbf16>
    %c0_1 = arith.constant 0 : index
    %c0_2 = arith.constant 0 : index
    %1 = vector.load %arg1[%c0_1, %c0_2] : memref<16x128xf32, #tpu.memory_space<vmem>>, vector<16x128xf32>
    %c0_3 = arith.constant 0 : index
    %c0_4 = arith.constant 0 : index
    %2 = vector.load %arg5[%c0_3, %c0_4] : memref<16x128xf32, #tpu.memory_space<vmem>>, vector<16x128xf32>
    tpu.vector_store %arg5[%c0_3, %c0_4], %1 {strides = array<i32>} : memref<16x128xf32, #tpu.memory_space<vmem>>, vector<16x128xf32>,
    %c0_5 = arith.constant 0 : index
    %c0_6 = arith.constant 0 : index
    %3 = vector.load %arg5[%c0_5, %c0_6] : memref<16x128xf32, #tpu.memory_space<vmem>>, vector<16x128xf32>
    %4 = arith.truncf %3 : vector<16x128xf32> to vector<16x128xbf16>
    %c0_7 = arith.constant 0 : index
    %c0_8 = arith.constant 0 : index
    %5 = vector.load %arg6[%c0_7, %c0_8] : memref<16x512xbf16, #tpu.memory_space<vmem>>, vector<16x128xbf16>
    tpu.vector_store %arg6[%c0_7, %c0_8], %4 {strides = array<i32>} : memref<16x512xbf16, #tpu.memory_space<vmem>>, vector<16x128xbf16>,
    %6 = arith.truncf %3 : vector<16x128xf32> to vector<16x128xbf16>
    %cst = arith.constant dense<0.000000e+00> : vector<16x128xf32>
    %7 = tpu.matmul %0, %6, %cst {dimension_numbers = #tpu.dot_dimension_numbers<[1], [0], [0], [1], [0, 0, 1, 1], [], []>} : vector<16x16xbf16>, vector<16x128xbf16>, vector<16x128xf32> -> vector<16x128xf32>
    %8 = arith.truncf %7 : vector<16x128xf32> to vector<16x128xbf16>
    %c0_9 = arith.constant 0 : index
    %c128 = arith.constant 128 : index
    %9 = vector.load %arg6[%c0_9, %c128] : memref<16x512xbf16, #tpu.memory_space<vmem>>, vector<16x128xbf16>
    tpu.vector_store %arg6[%c0_9, %c128], %8 {strides = array<i32>} : memref<16x512xbf16, #tpu.memory_space<vmem>>, vector<16x128xbf16>,
    %10 = arith.truncf %7 : vector<16x128xf32> to vector<16x128xbf16>
    %cst_10 = arith.constant dense<0.000000e+00> : vector<16x128xf32>
    %11 = tpu.matmul %0, %10, %cst_10 {dimension_numbers = #tpu.dot_dimension_numbers<[1], [0], [0], [1], [0, 0, 1, 1], [], []>} : vector<16x16xbf16>, vector<16x128xbf16>, vector<16x128xf32> -> vector<16x128xf32>
    %12 = arith.truncf %11 : vector<16x128xf32> to vector<16x128xbf16>
    %c0_11 = arith.constant 0 : index
    %c256 = arith.constant 256 : index
    %13 = vector.load %arg6[%c0_11, %c256] : memref<16x512xbf16, #tpu.memory_space<vmem>>, vector<16x128xbf16>
    tpu.vector_store %arg6[%c0_11, %c256], %12 {strides = array<i32>} : memref<16x512xbf16, #tpu.memory_space<vmem>>, vector<16x128xbf16>,
    %14 = arith.truncf %11 : vector<16x128xf32> to vector<16x128xbf16>
    %cst_12 = arith.constant dense<0.000000e+00> : vector<16x128xf32>
    %15 = tpu.matmul %0, %14, %cst_12 {dimension_numbers = #tpu.dot_dimension_numbers<[1], [0], [0], [1], [0, 0, 1, 1], [], []>} : vector<16x16xbf16>, vector<16x128xbf16>, vector<16x128xf32> -> vector<16x128xf32>
    %16 = arith.truncf %15 : vector<16x128xf32> to vector<16x128xbf16>
    %c0_13 = arith.constant 0 : index
    %c384 = arith.constant 384 : index
    %17 = vector.load %arg6[%c0_13, %c384] : memref<16x512xbf16, #tpu.memory_space<vmem>>, vector<16x128xbf16>
    tpu.vector_store %arg6[%c0_13, %c384], %16 {strides = array<i32>} : memref<16x512xbf16, #tpu.memory_space<vmem>>, vector<16x128xbf16>,
    %c0_14 = arith.constant 0 : index
    %c0_15 = arith.constant 0 : index
    %18 = vector.load %arg6[%c0_14, %c0_15] : memref<16x512xbf16, #tpu.memory_space<vmem>>, vector<16x512xbf16>
    %c0_16 = arith.constant 0 : index
    %c0_17 = arith.constant 0 : index
    %c0_18 = arith.constant 0 : index
    %19 = vector.load %arg2[%c0_16, %c0_17, %c0_18] : memref<3x512x128xbf16, #tpu.memory_space<vmem>>, vector<1x512x128xbf16>
    %20 = vector.shape_cast %19 : vector<1x512x128xbf16> to vector<512x128xbf16>
    %cst_19 = arith.constant dense<0.000000e+00> : vector<16x128xf32>
    %21 = tpu.matmul %18, %20, %cst_19 {dimension_numbers = #tpu.dot_dimension_numbers<[1], [0], [0], [1], [0, 0, 1, 1], [], []>} : vector<16x512xbf16>, vector<512x128xbf16>, vector<16x128xf32> -> vector<16x128xf32>
    %c0_20 = arith.constant 0 : index
    %c0_21 = arith.constant 0 : index
    %c0_22 = arith.constant 0 : index
    %22 = vector.load %arg3[%c0_20, %c0_21, %c0_22] : memref<3x1x128xf32, #tpu.memory_space<vmem>>, vector<1x1x128xf32>
    %23 = vector.shape_cast %22 : vector<1x1x128xf32> to vector<1x128xf32>
    %24 = vector.broadcast %23 : vector<1x128xf32> to vector<16x128xf32>
    %25 = arith.addf %21, %24 : vector<16x128xf32>
    %cst_23 = arith.constant 0.000000e+00 : f32
    %26 = vector.broadcast %cst_23 : f32 to vector<16x128xf32>
    %27 = arith.maximumf %25, %26 : vector<16x128xf32>
    %c0_24 = arith.constant 0 : index
    %c0_25 = arith.constant 0 : index
    %28 = vector.load %arg5[%c0_24, %c0_25] : memref<16x128xf32, #tpu.memory_space<vmem>>, vector<16x128xf32>
    tpu.vector_store %arg5[%c0_24, %c0_25], %27 {strides = array<i32>} : memref<16x128xf32, #tpu.memory_space<vmem>>, vector<16x128xf32>,
    %c0_26 = arith.constant 0 : index
    %c0_27 = arith.constant 0 : index
    %29 = vector.load %arg5[%c0_26, %c0_27] : memref<16x128xf32, #tpu.memory_space<vmem>>, vector<16x128xf32>
    %30 = arith.truncf %29 : vector<16x128xf32> to vector<16x128xbf16>
    %c0_28 = arith.constant 0 : index
    %c0_29 = arith.constant 0 : index
    %31 = vector.load %arg6[%c0_28, %c0_29] : memref<16x512xbf16, #tpu.memory_space<vmem>>, vector<16x128xbf16>
    tpu.vector_store %arg6[%c0_28, %c0_29], %30 {strides = array<i32>} : memref<16x512xbf16, #tpu.memory_space<vmem>>, vector<16x128xbf16>,
    %32 = arith.truncf %29 : vector<16x128xf32> to vector<16x128xbf16>
    %cst_30 = arith.constant dense<0.000000e+00> : vector<16x128xf32>
    %33 = tpu.matmul %0, %32, %cst_30 {dimension_numbers = #tpu.dot_dimension_numbers<[1], [0], [0], [1], [0, 0, 1, 1], [], []>} : vector<16x16xbf16>, vector<16x128xbf16>, vector<16x128xf32> -> vector<16x128xf32>
    %34 = arith.truncf %33 : vector<16x128xf32> to vector<16x128xbf16>
    %c0_31 = arith.constant 0 : index
    %c128_32 = arith.constant 128 : index
    %35 = vector.load %arg6[%c0_31, %c128_32] : memref<16x512xbf16, #tpu.memory_space<vmem>>, vector<16x128xbf16>
    tpu.vector_store %arg6[%c0_31, %c128_32], %34 {strides = array<i32>} : memref<16x512xbf16, #tpu.memory_space<vmem>>, vector<16x128xbf16>,
    %36 = arith.truncf %33 : vector<16x128xf32> to vector<16x128xbf16>
    %cst_33 = arith.constant dense<0.000000e+00> : vector<16x128xf32>
    %37 = tpu.matmul %0, %36, %cst_33 {dimension_numbers = #tpu.dot_dimension_numbers<[1], [0], [0], [1], [0, 0, 1, 1], [], []>} : vector<16x16xbf16>, vector<16x128xbf16>, vector<16x128xf32> -> vector<16x128xf32>
    %38 = arith.truncf %37 : vector<16x128xf32> to vector<16x128xbf16>
    %c0_34 = arith.constant 0 : index
    %c256_35 = arith.constant 256 : index
    %39 = vector.load %arg6[%c0_34, %c256_35] : memref<16x512xbf16, #tpu.memory_space<vmem>>, vector<16x128xbf16>
    tpu.vector_store %arg6[%c0_34, %c256_35], %38 {strides = array<i32>} : memref<16x512xbf16, #tpu.memory_space<vmem>>, vector<16x128xbf16>,
    %40 = arith.truncf %37 : vector<16x128xf32> to vector<16x128xbf16>
    %cst_36 = arith.constant dense<0.000000e+00> : vector<16x128xf32>
    %41 = tpu.matmul %0, %40, %cst_36 {dimension_numbers = #tpu.dot_dimension_numbers<[1], [0], [0], [1], [0, 0, 1, 1], [], []>} : vector<16x16xbf16>, vector<16x128xbf16>, vector<16x128xf32> -> vector<16x128xf32>
    %42 = arith.truncf %41 : vector<16x128xf32> to vector<16x128xbf16>
    %c0_37 = arith.constant 0 : index
    %c384_38 = arith.constant 384 : index
    %43 = vector.load %arg6[%c0_37, %c384_38] : memref<16x512xbf16, #tpu.memory_space<vmem>>, vector<16x128xbf16>
    tpu.vector_store %arg6[%c0_37, %c384_38], %42 {strides = array<i32>} : memref<16x512xbf16, #tpu.memory_space<vmem>>, vector<16x128xbf16>,
    %c0_39 = arith.constant 0 : index
    %c0_40 = arith.constant 0 : index
    %44 = vector.load %arg6[%c0_39, %c0_40] : memref<16x512xbf16, #tpu.memory_space<vmem>>, vector<16x512xbf16>
    %c1 = arith.constant 1 : index
    %c0_41 = arith.constant 0 : index
    %c0_42 = arith.constant 0 : index
    %45 = vector.load %arg2[%c1, %c0_41, %c0_42] : memref<3x512x128xbf16, #tpu.memory_space<vmem>>, vector<1x512x128xbf16>
    %46 = vector.shape_cast %45 : vector<1x512x128xbf16> to vector<512x128xbf16>
    %cst_43 = arith.constant dense<0.000000e+00> : vector<16x128xf32>
    %47 = tpu.matmul %44, %46, %cst_43 {dimension_numbers = #tpu.dot_dimension_numbers<[1], [0], [0], [1], [0, 0, 1, 1], [], []>} : vector<16x512xbf16>, vector<512x128xbf16>, vector<16x128xf32> -> vector<16x128xf32>
    %c1_44 = arith.constant 1 : index
    %c0_45 = arith.constant 0 : index
    %c0_46 = arith.constant 0 : index
    %48 = vector.load %arg3[%c1_44, %c0_45, %c0_46] : memref<3x1x128xf32, #tpu.memory_space<vmem>>, vector<1x1x128xf32>
    %49 = vector.shape_cast %48 : vector<1x1x128xf32> to vector<1x128xf32>
    %50 = vector.broadcast %49 : vector<1x128xf32> to vector<16x128xf32>
    %51 = arith.addf %47, %50 : vector<16x128xf32>
    %cst_47 = arith.constant 0.000000e+00 : f32
    %52 = vector.broadcast %cst_47 : f32 to vector<16x128xf32>
    %53 = arith.maximumf %51, %52 : vector<16x128xf32>
    %c0_48 = arith.constant 0 : index
    %c0_49 = arith.constant 0 : index
    %54 = vector.load %arg5[%c0_48, %c0_49] : memref<16x128xf32, #tpu.memory_space<vmem>>, vector<16x128xf32>
    tpu.vector_store %arg5[%c0_48, %c0_49], %53 {strides = array<i32>} : memref<16x128xf32, #tpu.memory_space<vmem>>, vector<16x128xf32>,
    %c0_50 = arith.constant 0 : index
    %c0_51 = arith.constant 0 : index
    %55 = vector.load %arg5[%c0_50, %c0_51] : memref<16x128xf32, #tpu.memory_space<vmem>>, vector<16x128xf32>
    %56 = arith.truncf %55 : vector<16x128xf32> to vector<16x128xbf16>
    %c0_52 = arith.constant 0 : index
    %c0_53 = arith.constant 0 : index
    %57 = vector.load %arg6[%c0_52, %c0_53] : memref<16x512xbf16, #tpu.memory_space<vmem>>, vector<16x128xbf16>
    tpu.vector_store %arg6[%c0_52, %c0_53], %56 {strides = array<i32>} : memref<16x512xbf16, #tpu.memory_space<vmem>>, vector<16x128xbf16>,
    %58 = arith.truncf %55 : vector<16x128xf32> to vector<16x128xbf16>
    %cst_54 = arith.constant dense<0.000000e+00> : vector<16x128xf32>
    %59 = tpu.matmul %0, %58, %cst_54 {dimension_numbers = #tpu.dot_dimension_numbers<[1], [0], [0], [1], [0, 0, 1, 1], [], []>} : vector<16x16xbf16>, vector<16x128xbf16>, vector<16x128xf32> -> vector<16x128xf32>
    %60 = arith.truncf %59 : vector<16x128xf32> to vector<16x128xbf16>
    %c0_55 = arith.constant 0 : index
    %c128_56 = arith.constant 128 : index
    %61 = vector.load %arg6[%c0_55, %c128_56] : memref<16x512xbf16, #tpu.memory_space<vmem>>, vector<16x128xbf16>
    tpu.vector_store %arg6[%c0_55, %c128_56], %60 {strides = array<i32>} : memref<16x512xbf16, #tpu.memory_space<vmem>>, vector<16x128xbf16>,
    %62 = arith.truncf %59 : vector<16x128xf32> to vector<16x128xbf16>
    %cst_57 = arith.constant dense<0.000000e+00> : vector<16x128xf32>
    %63 = tpu.matmul %0, %62, %cst_57 {dimension_numbers = #tpu.dot_dimension_numbers<[1], [0], [0], [1], [0, 0, 1, 1], [], []>} : vector<16x16xbf16>, vector<16x128xbf16>, vector<16x128xf32> -> vector<16x128xf32>
    %64 = arith.truncf %63 : vector<16x128xf32> to vector<16x128xbf16>
    %c0_58 = arith.constant 0 : index
    %c256_59 = arith.constant 256 : index
    %65 = vector.load %arg6[%c0_58, %c256_59] : memref<16x512xbf16, #tpu.memory_space<vmem>>, vector<16x128xbf16>
    tpu.vector_store %arg6[%c0_58, %c256_59], %64 {strides = array<i32>} : memref<16x512xbf16, #tpu.memory_space<vmem>>, vector<16x128xbf16>,
    %66 = arith.truncf %63 : vector<16x128xf32> to vector<16x128xbf16>
    %cst_60 = arith.constant dense<0.000000e+00> : vector<16x128xf32>
    %67 = tpu.matmul %0, %66, %cst_60 {dimension_numbers = #tpu.dot_dimension_numbers<[1], [0], [0], [1], [0, 0, 1, 1], [], []>} : vector<16x16xbf16>, vector<16x128xbf16>, vector<16x128xf32> -> vector<16x128xf32>
    %68 = arith.truncf %67 : vector<16x128xf32> to vector<16x128xbf16>
    %c0_61 = arith.constant 0 : index
    %c384_62 = arith.constant 384 : index
    %69 = vector.load %arg6[%c0_61, %c384_62] : memref<16x512xbf16, #tpu.memory_space<vmem>>, vector<16x128xbf16>
    tpu.vector_store %arg6[%c0_61, %c384_62], %68 {strides = array<i32>} : memref<16x512xbf16, #tpu.memory_space<vmem>>, vector<16x128xbf16>,
    %c0_63 = arith.constant 0 : index
    %c0_64 = arith.constant 0 : index
    %70 = vector.load %arg6[%c0_63, %c0_64] : memref<16x512xbf16, #tpu.memory_space<vmem>>, vector<16x512xbf16>
    %c2 = arith.constant 2 : index
    %c0_65 = arith.constant 0 : index
    %c0_66 = arith.constant 0 : index
    %71 = vector.load %arg2[%c2, %c0_65, %c0_66] : memref<3x512x128xbf16, #tpu.memory_space<vmem>>, vector<1x512x128xbf16>
    %72 = vector.shape_cast %71 : vector<1x512x128xbf16> to vector<512x128xbf16>
    %cst_67 = arith.constant dense<0.000000e+00> : vector<16x128xf32>
    %73 = tpu.matmul %70, %72, %cst_67 {dimension_numbers = #tpu.dot_dimension_numbers<[1], [0], [0], [1], [0, 0, 1, 1], [], []>} : vector<16x512xbf16>, vector<512x128xbf16>, vector<16x128xf32> -> vector<16x128xf32>
    %c2_68 = arith.constant 2 : index
    %c0_69 = arith.constant 0 : index
    %c0_70 = arith.constant 0 : index
    %74 = vector.load %arg3[%c2_68, %c0_69, %c0_70] : memref<3x1x128xf32, #tpu.memory_space<vmem>>, vector<1x1x128xf32>
    %75 = vector.shape_cast %74 : vector<1x1x128xf32> to vector<1x128xf32>
    %76 = vector.broadcast %75 : vector<1x128xf32> to vector<16x128xf32>
    %77 = arith.addf %73, %76 : vector<16x128xf32>
    %78 = math.tanh %77 : vector<16x128xf32>
    %c0_71 = arith.constant 0 : index
    %c0_72 = arith.constant 0 : index
    %79 = vector.load %arg4[%c0_71, %c0_72] : memref<16x128xf32, #tpu.memory_space<vmem>>, vector<16x128xf32>
    tpu.vector_store %arg4[%c0_71, %c0_72], %78 {strides = array<i32>} : memref<16x128xf32, #tpu.memory_space<vmem>>, vector<16x128xf32>,
    return
  }
}

</mosaic_0001>

<llo_original>
// kernel: tpu_custom_call.1
$region0: #{tpu_custom_call.1}
  #allocation0 [shape = 'u32[]', space=smem, size = 0x4, offset = 0x4, fixed_abs, tag = 'smem constant byte address 0x4 - core index']
  #allocation1 [shape = 'u32[144,128]{1,0:T(1,128)}', space=vmem, size = 0x12000, scoped, tag = 'internal scratch']
  #allocation2 [shape = 'f32[16,128]{1,0:T(8,128)}', space=vmem, size = 0x2000, scoped, tag = 'scratch operand']
  #allocation3 [shape = 'bf16[16,512]{1,0:T(16,128)(2,1)}', space=vmem, size = 0x4000, scoped, tag = 'scratch operand']
  %s0 = inlined_call_operand.hbm [shape: bf16[16,16], index: 0, kind: input, shape index: {}]
  %s1 = inlined_call_operand.hbm [shape: f32[16,128], index: 1, kind: input, shape index: {}]
  %s2 = inlined_call_operand.hbm [shape: bf16[3,512,128], index: 2, kind: input, shape index: {}]
  %s3 = inlined_call_operand.vmem [shape: f32[3,1,128], index: 3, kind: input, shape index: {}]
  %s4 = inlined_call_operand.hbm [shape: f32[16,128], index: 4, kind: output, shape index: {}]
  %s5 = sld [smem:[#allocation0]]
  $region38: #{tpu_custom_call.1} parent=0
    _
  %s7 = ssub.s32 1, %s5
  %s8 = scalar_select 0, %s7, %s5
  $region1: #{tpu_custom_call.1} parent=0
    #allocation4 [shape = 'u8[4096]{0}', space=vmem, size = 0x1000, scoped, tag = 'input window, operand 0, single buffered']
    #allocation5 [shape = 's32[1]{0}', space=sflag, size = 0x4, scoped, tag = 'scoped memory for tpu_custom_call.1']
    #allocation6 [shape = 's32[1]{0}', space=sflag, size = 0x4, scoped, tag = 'scoped memory for tpu_custom_call.1']
    #allocation7 [shape = 'u8[8192]{0}', space=vmem, size = 0x2000, scoped, tag = 'input window, operand 1, single buffered']
    #allocation8 [shape = 's32[1]{0}', space=sflag, size = 0x4, scoped, tag = 'scoped memory for tpu_custom_call.1']
    #allocation9 [shape = 'u8[393216]{0}', space=vmem, size = 0x60000, scoped, tag = 'input window, operand 2, single buffered']
    #allocation10 [shape = 'u8[8192]{0}', space=vmem, size = 0x2000, scoped, tag = 'output window, operand 0, single buffered']
    %9 = vsyncpa [#allocation5], 0
    %10 = vsyncpa [#allocation8], 0
    %11 = vsyncpa [#allocation6], 0
    // Predicated region
    $region2: #{tpu_custom_call.1} parent=1 // pred_check
      _
    $region3: #{tpu_custom_call.1} parent=1 // pred_check_branch
      %13 = sbr.rel (0) target = $region5
    $region4: #{tpu_custom_call.1} parent=1 // pred_region
      %s15 = ssub.s32 128, 128
      %16 = vsyncadd [#allocation5], %s15
      %s17 = sshll.u32 [#allocation4], 4
      %s18 = int_to_ptr.vmem [resolvable:$true] %s17
      %23 = dma.hbm_to_vmem [thread:$0]  %s0, 128, %s18, [#allocation5], 64, 64, 4
    $region5: #{tpu_custom_call.1} parent=1 // pred_fallthru
      _
    // Predicated region
    $region6: #{tpu_custom_call.1} parent=1 // pred_check
      _
    $region7: #{tpu_custom_call.1} parent=1 // pred_check_branch
      %25 = sbr.rel (0) target = $region9
    $region8: #{tpu_custom_call.1} parent=1 // pred_region
      %s27 = ssub.s32 256, 256
      %28 = vsyncadd [#allocation8], %s27
      %s29 = sshll.u32 [#allocation7], 4
      %s30 = int_to_ptr.vmem [resolvable:$true] %s29
      %35 = dma.hbm_to_vmem [thread:$0]  %s1, 256, %s30, [#allocation8], 128, 128, 8
    $region9: #{tpu_custom_call.1} parent=1 // pred_fallthru
      _
    // Predicated region
    $region10: #{tpu_custom_call.1} parent=1 // pred_check
      _
    $region11: #{tpu_custom_call.1} parent=1 // pred_check_branch
      %37 = sbr.rel (0) target = $region13
    $region12: #{tpu_custom_call.1} parent=1 // pred_region
      %s39 = ssub.s32 12288, 12288
      %40 = vsyncadd [#allocation8], %s39
      %s41 = sshll.u32 [#allocation9], 4
      %s42 = int_to_ptr.vmem [resolvable:$true] %s41
      %47 = dma.hbm_to_vmem [thread:$0]  %s2, 12288, %s42, [#allocation8], 64, 64, 4
    $region13: #{tpu_custom_call.1} parent=1 // pred_fallthru
      _
    // Predicated region
    $region14: #{tpu_custom_call.1} parent=1 // pred_check
      _
    $region15: #{tpu_custom_call.1} parent=1 // pred_check_branch
      %49 = sbr.rel (0) target = $region17
    $region16: #{tpu_custom_call.1} parent=1 // pred_region
      _
    $region17: #{tpu_custom_call.1} parent=1 // pred_fallthru
      _
    // Predicated region
    $region18: #{tpu_custom_call.1} parent=1 // pred_check
      _
    $region19: #{tpu_custom_call.1} parent=1 // pred_check_branch
      %51 = sbr.rel (0) target = $region21
    $region20: #{tpu_custom_call.1} parent=1 // pred_region
      %52 = dma.done [#allocation5], 128
    $region21: #{tpu_custom_call.1} parent=1 // pred_fallthru
      _
    // Predicated region
    $region22: #{tpu_custom_call.1} parent=1 // pred_check
      _
    $region23: #{tpu_custom_call.1} parent=1 // pred_check_branch
      %54 = sbr.rel (0) target = $region25
    $region24: #{tpu_custom_call.1} parent=1 // pred_region
      %55 = dma.done [#allocation8], 256
    $region25: #{tpu_custom_call.1} parent=1 // pred_fallthru
      _
    // Predicated region
    $region26: #{tpu_custom_call.1} parent=1 // pred_check
      _
    $region27: #{tpu_custom_call.1} parent=1 // pred_check_branch
      %57 = sbr.rel (0) target = $region29
    $region28: #{tpu_custom_call.1} parent=1 // pred_region
      %58 = dma.done [#allocation8], 12288
    $region29: #{tpu_custom_call.1} parent=1 // pred_fallthru
      _
    %v60 = vld [vmem:[#allocation4] sm:$0xf]
    %v61 = vld [vmem:[#allocation4 + $0x4] sm:$0xf]
    %v62 = vld [vmem:[#allocation7] sm:$0xff]
    %v63 = vld [vmem:[#allocation7 + $0x8] sm:$0xff]
    %64 = vst [vmem:[#allocation2] sm:$0xff] %v62
    %65 = vst [vmem:[#allocation2 + $0x8] sm:$0xff] %v63
    %v66 = vld [vmem:[#allocation2] sm:$0xff]
    %v67 = vld [vmem:[#allocation2 + $0x8] sm:$0xff]
    %v68 = vpack.c.bf16 %v67, %v66
    %69 = vst [vmem:[#allocation3] sm:$0xff] %v68
    %v72 = vunpack.c.l.b16 %v60
    %v73 = vunpack.c.l.b16 %v61
    %v74 = vpack.c.b16 %v73, %v72
    %vm75 = vcmask 130048
    %v77 = vsel %vm75, %v74, 0
    %79 = vmatprep.subr.bf16.mxu0 0
    %80 = vmatpush1.bf16.msra.mxu0 %v68
    %81 = vmatprep.subr.bf16.mxu0 0
    %82 = vmatpush1.bf16.msra.mxu0 0
    %83 = vmatprep.subr.bf16.mxu0 0
    %84 = vmatpush1.bf16.msra.mxu0 0
    %85 = vmatprep.subr.bf16.mxu0 0
    %86 = vmatpush1.bf16.msra.mxu0 0
    %87 = vmatprep.subr.bf16.mxu0 0
    %88 = vmatpush1.bf16.msra.mxu0 0
    %89 = vmatprep.subr.bf16.mxu0 0
    %90 = vmatpush1.bf16.msra.mxu0 0
    %91 = vmatprep.subr.bf16.mxu0 0
    %92 = vmatpush1.bf16.msra.mxu0 0
    %93 = vmatprep.subr.bf16.mxu0 0
    %94 = vmatpush1.bf16.msra.mxu0 0
    %95 = vmatprep.subr.bf16.mxu0 0
    %96 = vmatpush1.bf16.msra.mxu0 0
    %97 = vmatprep.subr.bf16.mxu0 0
    %98 = vmatpush1.bf16.msra.mxu0 0
    %99 = vmatprep.subr.bf16.mxu0 0
    %100 = vmatpush1.bf16.msra.mxu0 0
    %101 = vmatprep.subr.bf16.mxu0 0
    %102 = vmatpush1.bf16.msra.mxu0 0
    %103 = vmatprep.subr.bf16.mxu0 0
    %104 = vmatpush1.bf16.msra.mxu0 0
    %105 = vmatprep.subr.bf16.mxu0 0
    %106 = vmatpush1.bf16.msra.mxu0 0
    %107 = vmatprep.subr.bf16.mxu0 0
    %108 = vmatpush1.bf16.msra.mxu0 0
    %109 = vmatprep.subr.bf16.mxu0 0
    %110 = vmatpush1.bf16.msra.mxu0 0
    %111 = vmatprep.mubr.bf16.mxu0 0
    %112 = vmatmul.mubr.bf16.gmra.mrb[0].mxu0 %v77
    %v113 = vpop.f32.mrb[0].mxu0
    %v114 = vadd.f32 0.0, %v113
    %v115 = vpop.f32.mrb[0].mxu0
    %v116 = vpop.f32.mrb[0].mxu0
    %v117 = vadd.f32 0.0, %v116
    %v118 = vpop.f32.mrb[0].mxu0
    %119 = vdwg.mxu0
    %v120 = vpack.c.bf16 %v117, %v114
    %121 = vst [vmem:[#allocation3 + $0x8] sm:$0xff] %v120
    %122 = vmatprep.subr.bf16.mxu0 0
    %123 = vmatpush1.bf16.msra.mxu0 %v120
    %124 = vmatprep.subr.bf16.mxu0 0
    %125 = vmatpush1.bf16.msra.mxu0 0
    %126 = vmatprep.subr.bf16.mxu0 0
    %127 = vmatpush1.bf16.msra.mxu0 0
    %128 = vmatprep.subr.bf16.mxu0 0
    %129 = vmatpush1.bf16.msra.mxu0 0
    %130 = vmatprep.subr.bf16.mxu0 0
    %131 = vmatpush1.bf16.msra.mxu0 0
    %132 = vmatprep.subr.bf16.mxu0 0
    %133 = vmatpush1.bf16.msra.mxu0 0
    %134 = vmatprep.subr.bf16.mxu0 0
    %135 = vmatpush1.bf16.msra.mxu0 0
    %136 = vmatprep.subr.bf16.mxu0 0
    %137 = vmatpush1.bf16.msra.mxu0 0
    %138 = vmatprep.subr.bf16.mxu0 0
    %139 = vmatpush1.bf16.msra.mxu0 0
    %140 = vmatprep.subr.bf16.mxu0 0
    %141 = vmatpush1.bf16.msra.mxu0 0
    %142 = vmatprep.subr.bf16.mxu0 0
    %143 = vmatpush1.bf16.msra.mxu0 0
    %144 = vmatprep.subr.bf16.mxu0 0
    %145 = vmatpush1.bf16.msra.mxu0 0
    %146 = vmatprep.subr.bf16.mxu0 0
    %147 = vmatpush1.bf16.msra.mxu0 0
    %148 = vmatprep.subr.bf16.mxu0 0
    %149 = vmatpush1.bf16.msra.mxu0 0
    %150 = vmatprep.subr.bf16.mxu0 0
    %151 = vmatpush1.bf16.msra.mxu0 0
    %152 = vmatprep.subr.bf16.mxu0 0
    %153 = vmatpush1.bf16.msra.mxu0 0
    %154 = vmatprep.mubr.bf16.mxu0 0
    %155 = vmatmul.mubr.bf16.gmra.mrb[0].mxu0 %v77
    %v156 = vpop.f32.mrb[0].mxu0
    %v157 = vadd.f32 0.0, %v156
    %v158 = vpop.f32.mrb[0].mxu0
    %v159 = vpop.f32.mrb[0].mxu0
    %v160 = vadd.f32 0.0, %v159
    %v161 = vpop.f32.mrb[0].mxu0
    %162 = vdwg.mxu0
    %v163 = vpack.c.bf16 %v160, %v157
    %164 = vst [vmem:[#allocation3 + $0x10] sm:$0xff] %v163
    %165 = vmatprep.subr.bf16.mxu0 0
    %166 = vmatpush1.bf16.msra.mxu0 %v163
    %167 = vmatprep.subr.bf16.mxu0 0
    %168 = vmatpush1.bf16.msra.mxu0 0
    %169 = vmatprep.subr.bf16.mxu0 0
    %170 = vmatpush1.bf16.msra.mxu0 0
    %171 = vmatprep.subr.bf16.mxu0 0
    %172 = vmatpush1.bf16.msra.mxu0 0
    %173 = vmatprep.subr.bf16.mxu0 0
    %174 = vmatpush1.bf16.msra.mxu0 0
    %175 = vmatprep.subr.bf16.mxu0 0
    %176 = vmatpush1.bf16.msra.mxu0 0
    %177 = vmatprep.subr.bf16.mxu0 0
    %178 = vmatpush1.bf16.msra.mxu0 0
    %179 = vmatprep.subr.bf16.mxu0 0
    %180 = vmatpush1.bf16.msra.mxu0 0
    %181 = vmatprep.subr.bf16.mxu0 0
    %182 = vmatpush1.bf16.msra.mxu0 0
    %183 = vmatprep.subr.bf16.mxu0 0
    %184 = vmatpush1.bf16.msra.mxu0 0
    %185 = vmatprep.subr.bf16.mxu0 0
    %186 = vmatpush1.bf16.msra.mxu0 0
    %187 = vmatprep.subr.bf16.mxu0 0
    %188 = vmatpush1.bf16.msra.mxu0 0
    %189 = vmatprep.subr.bf16.mxu0 0
    %190 = vmatpush1.bf16.msra.mxu0 0
    %191 = vmatprep.subr.bf16.mxu0 0
    %192 = vmatpush1.bf16.msra.mxu0 0
    %193 = vmatprep.subr.bf16.mxu0 0
    %194 = vmatpush1.bf16.msra.mxu0 0
    %195 = vmatprep.subr.bf16.mxu0 0
    %196 = vmatpush1.bf16.msra.mxu0 0
    %197 = vmatprep.mubr.bf16.mxu0 0
    %198 = vmatmul.mubr.bf16.gmra.mrb[0].mxu0 %v77
    %v199 = vpop.f32.mrb[0].mxu0
    %v200 = vadd.f32 0.0, %v199
    %v201 = vpop.f32.mrb[0].mxu0
    %v202 = vpop.f32.mrb[0].mxu0
    %v203 = vadd.f32 0.0, %v202
    %v204 = vpop.f32.mrb[0].mxu0
    %205 = vdwg.mxu0
    %v206 = vpack.c.bf16 %v203, %v200
    %207 = vst [vmem:[#allocation3 + $0x18] sm:$0xff] %v206
    %v208 = vld [vmem:[#allocation3] sm:$0xff]
    %v209 = vld [vmem:[#allocation3 + $0x8] sm:$0xff]
    %v210 = vld [vmem:[#allocation3 + $0x10] sm:$0xff]
    %v211 = vld [vmem:[#allocation3 + $0x18] sm:$0xff]
    %v212 = vld [vmem:[#allocation9] sm:$0xf]
    %v213 = vld [vmem:[#allocation9 + $0x4] sm:$0xf]
    %v214 = vld [vmem:[#allocation9 + $0x8] sm:$0xf]
    %v215 = vld [vmem:[#allocation9 + $0xc] sm:$0xf]
    %v216 = vld [vmem:[#allocation9 + $0x10] sm:$0xf]
    %v217 = vld [vmem:[#allocation9 + $0x14] sm:$0xf]
    %v218 = vld [vmem:[#allocation9 + $0x18] sm:$0xf]
    %v219 = vld [vmem:[#allocation9 + $0x1c] sm:$0xf]
    %v220 = vld [vmem:[#allocation9 + $0x20] sm:$0xf]
    %v221 = vld [vmem:[#allocation9 + $0x24] sm:$0xf]
    %v222 = vld [vmem:[#allocation9 + $0x28] sm:$0xf]
    %v223 = vld [vmem:[#allocation9 + $0x2c] sm:$0xf]
    %v224 = vld [vmem:[#allocation9 + $0x30] sm:$0xf]
    %v225 = vld [vmem:[#allocation9 + $0x34] sm:$0xf]
    %v226 = vld [vmem:[#allocation9 + $0x38] sm:$0xf]
    %v227 = vld [vmem:[#allocation9 + $0x3c] sm:$0xf]
    %v228 = vld [vmem:[#allocation9 + $0x40] sm:$0xf]
    %v229 = vld [vmem:[#allocation9 + $0x44] sm:$0xf]
    %v230 = vld [vmem:[#allocation9 + $0x48] sm:$0xf]
    %v231 = vld [vmem:[#allocation9 + $0x4c] sm:$0xf]
    %v232 = vld [vmem:[#allocation9 + $0x50] sm:$0xf]
    %v233 = vld [vmem:[#allocation9 + $0x54] sm:$0xf]
    %v234 = vld [vmem:[#allocation9 + $0x58] sm:$0xf]
    %v235 = vld [vmem:[#allocation9 + $0x5c] sm:$0xf]
    %v236 = vld [vmem:[#allocation9 + $0x60] sm:$0xf]
    %v237 = vld [vmem:[#allocation9 + $0x64] sm:$0xf]
    %v238 = vld [vmem:[#allocation9 + $0x68] sm:$0xf]
    %v239 = vld [vmem:[#allocation9 + $0x6c] sm:$0xf]
    %v240 = vld [vmem:[#allocation9 + $0x70] sm:$0xf]
    %v241 = vld [vmem:[#allocation9 + $0x74] sm:$0xf]
    %v242 = vld [vmem:[#allocation9 + $0x78] sm:$0xf]
    %v243 = vld [vmem:[#allocation9 + $0x7c] sm:$0xf]
    %v244 = vld [vmem:[#allocation9 + $0x80] sm:$0xf]
    %v245 = vld [vmem:[#allocation9 + $0x84] sm:$0xf]
    %v246 = vld [vmem:[#allocation9 + $0x88] sm:$0xf]
    %v247 = vld [vmem:[#allocation9 + $0x8c] sm:$0xf]
    %v248 = vld [vmem:[#allocation9 + $0x90] sm:$0xf]
    %v249 = vld [vmem:[#allocation9 + $0x94] sm:$0xf]
    %v250 = vld [vmem:[#allocation9 + $0x98] sm:$0xf]
    %v251 = vld [vmem:[#allocation9 + $0x9c] sm:$0xf]
    %v252 = vld [vmem:[#allocation9 + $0xa0] sm:$0xf]
    %v253 = vld [vmem:[#allocation9 + $0xa4] sm:$0xf]
    %v254 = vld [vmem:[#allocation9 + $0xa8] sm:$0xf]
    %v255 = vld [vmem:[#allocation9 + $0xac] sm:$0xf]
    %v256 = vld [vmem:[#allocation9 + $0xb0] sm:$0xf]
    %v257 = vld [vmem:[#allocation9 + $0xb4] sm:$0xf]
    %v258 = vld [vmem:[#allocation9 + $0xb8] sm:$0xf]
    %v259 = vld [vmem:[#allocation9 + $0xbc] sm:$0xf]
    %v260 = vld [vmem:[#allocation9 + $0xc0] sm:$0xf]
    %v261 = vld [vmem:[#allocation9 + $0xc4] sm:$0xf]
    %v262 = vld [vmem:[#allocation9 + $0xc8] sm:$0xf]
    %v263 = vld [vmem:[#allocation9 + $0xcc] sm:$0xf]
    %v264 = vld [vmem:[#allocation9 + $0xd0] sm:$0xf]
    %v265 = vld [vmem:[#allocation9 + $0xd4] sm:$0xf]
    %v266 = vld [vmem:[#allocation9 + $0xd8] sm:$0xf]
    %v267 = vld [vmem:[#allocation9 + $0xdc] sm:$0xf]
    %v268 = vld [vmem:[#allocation9 + $0xe0] sm:$0xf]
    %v269 = vld [vmem:[#allocation9 + $0xe4] sm:$0xf]
    %v270 = vld [vmem:[#allocation9 + $0xe8] sm:$0xf]
    %v271 = vld [vmem:[#allocation9 + $0xec] sm:$0xf]
    %v272 = vld [vmem:[#allocation9 + $0xf0] sm:$0xf]
    %v273 = vld [vmem:[#allocation9 + $0xf4] sm:$0xf]
    %v274 = vld [vmem:[#allocation9 + $0xf8] sm:$0xf]
    %v275 = vld [vmem:[#allocation9 + $0xfc] sm:$0xf]
    %v276 = vld [vmem:[%s3] sm:$0x1]
    %v278 = vlaneseq
    %v279 = vshrl.u32 %v278, 7
    %v280 = vsub.s32 0, %v279
    %v281 = vrot.slane %v276, %v280
    %v347 = vunpack.c.l.b16 %v212
    %v348 = vunpack.c.l.b16 %v213
    %v349 = vunpack.c.l.b16 %v214
    %v350 = vunpack.c.l.b16 %v215
    %v351 = vunpack.c.l.b16 %v216
    %v352 = vunpack.c.l.b16 %v217
    %v353 = vunpack.c.l.b16 %v218
    %v354 = vunpack.c.l.b16 %v219
    %v355 = vunpack.c.l.b16 %v220
    %v356 = vunpack.c.l.b16 %v221
    %v357 = vunpack.c.l.b16 %v222
    %v358 = vunpack.c.l.b16 %v223
    %v359 = vunpack.c.l.b16 %v224
    %v360 = vunpack.c.l.b16 %v225
    %v361 = vunpack.c.l.b16 %v226
    %v362 = vunpack.c.l.b16 %v227
    %v363 = vunpack.c.l.b16 %v228
    %v364 = vunpack.c.l.b16 %v229
    %v365 = vunpack.c.l.b16 %v230
    %v366 = vunpack.c.l.b16 %v231
    %v367 = vunpack.c.l.b16 %v232
    %v368 = vunpack.c.l.b16 %v233
    %v369 = vunpack.c.l.b16 %v234
    %v370 = vunpack.c.l.b16 %v235
    %v371 = vunpack.c.l.b16 %v236
    %v372 = vunpack.c.l.b16 %v237
    %v373 = vunpack.c.l.b16 %v238
    %v374 = vunpack.c.l.b16 %v239
    %v375 = vunpack.c.l.b16 %v240
    %v376 = vunpack.c.l.b16 %v241
    %v377 = vunpack.c.l.b16 %v242
    %v378 = vunpack.c.l.b16 %v243
    %v379 = vunpack.c.l.b16 %v244
    %v380 = vunpack.c.l.b16 %v245
    %v381 = vunpack.c.l.b16 %v246
    %v382 = vunpack.c.l.b16 %v247
    %v383 = vunpack.c.l.b16 %v248
    %v384 = vunpack.c.l.b16 %v249
    %v385 = vunpack.c.l.b16 %v250
    %v386 = vunpack.c.l.b16 %v251
    %v387 = vunpack.c.l.b16 %v252
    %v388 = vunpack.c.l.b16 %v253
    %v389 = vunpack.c.l.b16 %v254
    %v390 = vunpack.c.l.b16 %v255
    %v391 = vunpack.c.l.b16 %v256
    %v392 = vunpack.c.l.b16 %v257
    %v393 = vunpack.c.l.b16 %v258
    %v394 = vunpack.c.l.b16 %v259
    %v395 = vunpack.c.l.b16 %v260
    %v396 = vunpack.c.l.b16 %v261
    %v397 = vunpack.c.l.b16 %v262
    %v398 = vunpack.c.l.b16 %v263
    %v399 = vunpack.c.l.b16 %v264
    %v400 = vunpack.c.l.b16 %v265
    %v401 = vunpack.c.l.b16 %v266
    %v402 = vunpack.c.l.b16 %v267
    %v403 = vunpack.c.l.b16 %v268
    %v404 = vunpack.c.l.b16 %v269
    %v405 = vunpack.c.l.b16 %v270
    %v406 = vunpack.c.l.b16 %v271
    %v407 = vunpack.c.l.b16 %v272
    %v408 = vunpack.c.l.b16 %v273
    %v409 = vunpack.c.l.b16 %v274
    %v410 = vunpack.c.l.b16 %v275
    %v411 = vpack.c.b16 %v348, %v347
    %v412 = vpack.c.b16 %v350, %v349
    %v413 = vpack.c.b16 %v352, %v351
    %v414 = vpack.c.b16 %v354, %v353
    %v415 = vpack.c.b16 %v356, %v355
    %v416 = vpack.c.b16 %v358, %v357
    %v417 = vpack.c.b16 %v360, %v359
    %v418 = vpack.c.b16 %v362, %v361
    %v419 = vpack.c.b16 %v364, %v363
    %v420 = vpack.c.b16 %v366, %v365
    %v421 = vpack.c.b16 %v368, %v367
    %v422 = vpack.c.b16 %v370, %v369
    %v423 = vpack.c.b16 %v372, %v371
    %v424 = vpack.c.b16 %v374, %v373
    %v425 = vpack.c.b16 %v376, %v375
    %v426 = vpack.c.b16 %v378, %v377
    %v427 = vpack.c.b16 %v380, %v379
    %v428 = vpack.c.b16 %v382, %v381
    %v429 = vpack.c.b16 %v384, %v383
    %v430 = vpack.c.b16 %v386, %v385
    %v431 = vpack.c.b16 %v388, %v387
    %v432 = vpack.c.b16 %v390, %v389
    %v433 = vpack.c.b16 %v392, %v391
    %v434 = vpack.c.b16 %v394, %v393
    %v435 = vpack.c.b16 %v396, %v395
    %v436 = vpack.c.b16 %v398, %v397
    %v437 = vpack.c.b16 %v400, %v399
    %v438 = vpack.c.b16 %v402, %v401
    %v439 = vpack.c.b16 %v404, %v403
    %v440 = vpack.c.b16 %v406, %v405
    %v441 = vpack.c.b16 %v408, %v407
    %v442 = vpack.c.b16 %v410, %v409
    %475 = vmatprep.subr.bf16.mxu0 0
    %476 = vmatpush1.bf16.msra.mxu0 %v411
    %477 = vmatprep.subr.bf16.mxu0 0
    %478 = vmatpush1.bf16.msra.mxu0 %v412
    %479 = vmatprep.subr.bf16.mxu0 0
    %480 = vmatpush1.bf16.msra.mxu0 %v413
    %481 = vmatprep.subr.bf16.mxu0 0
    %482 = vmatpush1.bf16.msra.mxu0 %v414
    %483 = vmatprep.subr.bf16.mxu0 0
    %484 = vmatpush1.bf16.msra.mxu0 %v415
    %485 = vmatprep.subr.bf16.mxu0 0
    %486 = vmatpush1.bf16.msra.mxu0 %v416
    %487 = vmatprep.subr.bf16.mxu0 0
    %488 = vmatpush1.bf16.msra.mxu0 %v417
    %489 = vmatprep.subr.bf16.mxu0 0
    %490 = vmatpush1.bf16.msra.mxu0 %v418
    %491 = vmatprep.subr.bf16.mxu0 0
    %492 = vmatpush1.bf16.msra.mxu0 %v419
    %493 = vmatprep.subr.bf16.mxu0 0
    %494 = vmatpush1.bf16.msra.mxu0 %v420
    %495 = vmatprep.subr.bf16.mxu0 0
    %496 = vmatpush1.bf16.msra.mxu0 %v421
    %497 = vmatprep.subr.bf16.mxu0 0
    %498 = vmatpush1.bf16.msra.mxu0 %v422
    %499 = vmatprep.subr.bf16.mxu0 0
    %500 = vmatpush1.bf16.msra.mxu0 %v423
    %501 = vmatprep.subr.bf16.mxu0 0
    %502 = vmatpush1.bf16.msra.mxu0 %v424
    %503 = vmatprep.subr.bf16.mxu0 0
    %504 = vmatpush1.bf16.msra.mxu0 %v425
    %505 = vmatprep.subr.bf16.mxu0 0
    %506 = vmatpush1.bf16.msra.mxu0 %v426
    %507 = vmatprep.mubr.bf16.mxu0 %v209
    %508 = vmatmul.mubr.bf16.gmra.mrb[0].mxu0 %v208
    %v509 = vpop.f32.mrb[0].mxu0
    %v510 = vadd.f32 %v281, %v509
    %v511 = vpop.f32.mrb[0].mxu0
    %v512 = vpop.f32.mrb[0].mxu0
    %v513 = vadd.f32 %v281, %v512
    %v514 = vpop.f32.mrb[0].mxu0
    %515 = vdwg.mxu0
    %516 = vmatprep.subr.bf16.mxu0 0
    %517 = vmatpush1.bf16.msra.mxu0 %v427
    %518 = vmatprep.subr.bf16.mxu0 0
    %519 = vmatpush1.bf16.msra.mxu0 %v428
    %520 = vmatprep.subr.bf16.mxu0 0
    %521 = vmatpush1.bf16.msra.mxu0 %v429
    %522 = vmatprep.subr.bf16.mxu0 0
    %523 = vmatpush1.bf16.msra.mxu0 %v430
    %524 = vmatprep.subr.bf16.mxu0 0
    %525 = vmatpush1.bf16.msra.mxu0 %v431
    %526 = vmatprep.subr.bf16.mxu0 0
    %527 = vmatpush1.bf16.msra.mxu0 %v432
    %528 = vmatprep.subr.bf16.mxu0 0
    %529 = vmatpush1.bf16.msra.mxu0 %v433
    %530 = vmatprep.subr.bf16.mxu0 0
    %531 = vmatpush1.bf16.msra.mxu0 %v434
    %532 = vmatprep.subr.bf16.mxu0 0
    %533 = vmatpush1.bf16.msra.mxu0 %v435
    %534 = vmatprep.subr.bf16.mxu0 0
    %535 = vmatpush1.bf16.msra.mxu0 %v436
    %536 = vmatprep.subr.bf16.mxu0 0
    %537 = vmatpush1.bf16.msra.mxu0 %v437
    %538 = vmatprep.subr.bf16.mxu0 0
    %539 = vmatpush1.bf16.msra.mxu0 %v438
    %540 = vmatprep.subr.bf16.mxu0 0
    %541 = vmatpush1.bf16.msra.mxu0 %v439
    %542 = vmatprep.subr.bf16.mxu0 0
    %543 = vmatpush1.bf16.msra.mxu0 %v440
    %544 = vmatprep.subr.bf16.mxu0 0
    %545 = vmatpush1.bf16.msra.mxu0 %v441
    %546 = vmatprep.subr.bf16.mxu0 0
    %547 = vmatpush1.bf16.msra.mxu0 %v442
    %548 = vmatprep.mubr.bf16.mxu0 %v211
    %549 = vmatmul.mubr.bf16.gmra.mrb[0].mxu0 %v210
    %v550 = vpop.f32.mrb[0].mxu0
    %v551 = vadd.f32 %v510, %v550
    %v552 = vpop.f32.mrb[0].mxu0
    %v553 = vpop.f32.mrb[0].mxu0
    %v554 = vadd.f32 %v513, %v553
    %v555 = vpop.f32.mrb[0].mxu0
    %556 = vdwg.mxu0
    %v557 = vmax.f32 %v551, 0.0
    %v558 = vmax.f32 %v554, 0.0
    %559 = vst [vmem:[#allocation2] sm:$0xff] %v557
    %560 = vst [vmem:[#allocation2 + $0x8] sm:$0xff] %v558
    %v561 = vld [vmem:[#allocation2] sm:$0xff]
    %v562 = vld [vmem:[#allocation2 + $0x8] sm:$0xff]
    %v563 = vpack.c.bf16 %v562, %v561
    %564 = vst [vmem:[#allocation3] sm:$0xff] %v563
    %565 = vmatprep.subr.bf16.mxu0 0
    %566 = vmatpush1.bf16.msra.mxu0 %v563
    %567 = vmatprep.subr.bf16.mxu0 0
    %568 = vmatpush1.bf16.msra.mxu0 0
    %569 = vmatprep.subr.bf16.mxu0 0
    %570 = vmatpush1.bf16.msra.mxu0 0
    %571 = vmatprep.subr.bf16.mxu0 0
    %572 = vmatpush1.bf16.msra.mxu0 0
    %573 = vmatprep.subr.bf16.mxu0 0
    %574 = vmatpush1.bf16.msra.mxu0 0
    %575 = vmatprep.subr.bf16.mxu0 0
    %576 = vmatpush1.bf16.msra.mxu0 0
    %577 = vmatprep.subr.bf16.mxu0 0
    %578 = vmatpush1.bf16.msra.mxu0 0
    %579 = vmatprep.subr.bf16.mxu0 0
    %580 = vmatpush1.bf16.msra.mxu0 0
    %581 = vmatprep.subr.bf16.mxu0 0
    %582 = vmatpush1.bf16.msra.mxu0 0
    %583 = vmatprep.subr.bf16.mxu0 0
    %584 = vmatpush1.bf16.msra.mxu0 0
    %585 = vmatprep.subr.bf16.mxu0 0
    %586 = vmatpush1.bf16.msra.mxu0 0
    %587 = vmatprep.subr.bf16.mxu0 0
    %588 = vmatpush1.bf16.msra.mxu0 0
    %589 = vmatprep.subr.bf16.mxu0 0
    %590 = vmatpush1.bf16.msra.mxu0 0
    %591 = vmatprep.subr.bf16.mxu0 0
    %592 = vmatpush1.bf16.msra.mxu0 0
    %593 = vmatprep.subr.bf16.mxu0 0
    %594 = vmatpush1.bf16.msra.mxu0 0
    %595 = vmatprep.subr.bf16.mxu0 0
    %596 = vmatpush1.bf16.msra.mxu0 0
    %597 = vmatprep.mubr.bf16.mxu0 0
    %598 = vmatmul.mubr.bf16.gmra.mrb[0].mxu0 %v77
    %v599 = vpop.f32.mrb[0].mxu0
    %v600 = vadd.f32 0.0, %v599
    %v601 = vpop.f32.mrb[0].mxu0
    %v602 = vpop.f32.mrb[0].mxu0
    %v603 = vadd.f32 0.0, %v602
    %v604 = vpop.f32.mrb[0].mxu0
    %605 = vdwg.mxu0
    %v606 = vpack.c.bf16 %v603, %v600
    %607 = vst [vmem:[#allocation3 + $0x8] sm:$0xff] %v606
    %608 = vmatprep.subr.bf16.mxu0 0
    %609 = vmatpush1.bf16.msra.mxu0 %v606
    %610 = vmatprep.subr.bf16.mxu0 0
    %611 = vmatpush1.bf16.msra.mxu0 0
    %612 = vmatprep.subr.bf16.mxu0 0
    %613 = vmatpush1.bf16.msra.mxu0 0
    %614 = vmatprep.subr.bf16.mxu0 0
    %615 = vmatpush1.bf16.msra.mxu0 0
    %616 = vmatprep.subr.bf16.mxu0 0
    %617 = vmatpush1.bf16.msra.mxu0 0
    %618 = vmatprep.subr.bf16.mxu0 0
    %619 = vmatpush1.bf16.msra.mxu0 0
    %620 = vmatprep.subr.bf16.mxu0 0
    %621 = vmatpush1.bf16.msra.mxu0 0
    %622 = vmatprep.subr.bf16.mxu0 0
    %623 = vmatpush1.bf16.msra.mxu0 0
    %624 = vmatprep.subr.bf16.mxu0 0
    %625 = vmatpush1.bf16.msra.mxu0 0
    %626 = vmatprep.subr.bf16.mxu0 0
    %627 = vmatpush1.bf16.msra.mxu0 0
    %628 = vmatprep.subr.bf16.mxu0 0
    %629 = vmatpush1.bf16.msra.mxu0 0
    %630 = vmatprep.subr.bf16.mxu0 0
    %631 = vmatpush1.bf16.msra.mxu0 0
    %632 = vmatprep.subr.bf16.mxu0 0
    %633 = vmatpush1.bf16.msra.mxu0 0
    %634 = vmatprep.subr.bf16.mxu0 0
    %635 = vmatpush1.bf16.msra.mxu0 0
    %636 = vmatprep.subr.bf16.mxu0 0
    %637 = vmatpush1.bf16.msra.mxu0 0
    %638 = vmatprep.subr.bf16.mxu0 0
    %639 = vmatpush1.bf16.msra.mxu0 0
    %640 = vmatprep.mubr.bf16.mxu0 0
    %641 = vmatmul.mubr.bf16.gmra.mrb[0].mxu0 %v77
    %v642 = vpop.f32.mrb[0].mxu0
    %v643 = vadd.f32 0.0, %v642
    %v644 = vpop.f32.mrb[0].mxu0
    %v645 = vpop.f32.mrb[0].mxu0
    %v646 = vadd.f32 0.0, %v645
    %v647 = vpop.f32.mrb[0].mxu0
    %648 = vdwg.mxu0
    %v649 = vpack.c.bf16 %v646, %v643
    %650 = vst [vmem:[#allocation3 + $0x10] sm:$0xff] %v649
    %651 = vmatprep.subr.bf16.mxu0 0
    %652 = vmatpush1.bf16.msra.mxu0 %v649
    %653 = vmatprep.subr.bf16.mxu0 0
    %654 = vmatpush1.bf16.msra.mxu0 0
    %655 = vmatprep.subr.bf16.mxu0 0
    %656 = vmatpush1.bf16.msra.mxu0 0
    %657 = vmatprep.subr.bf16.mxu0 0
    %658 = vmatpush1.bf16.msra.mxu0 0
    %659 = vmatprep.subr.bf16.mxu0 0
    %660 = vmatpush1.bf16.msra.mxu0 0
    %661 = vmatprep.subr.bf16.mxu0 0
    %662 = vmatpush1.bf16.msra.mxu0 0
    %663 = vmatprep.subr.bf16.mxu0 0
    %664 = vmatpush1.bf16.msra.mxu0 0
    %665 = vmatprep.subr.bf16.mxu0 0
    %666 = vmatpush1.bf16.msra.mxu0 0
    %667 = vmatprep.subr.bf16.mxu0 0
    %668 = vmatpush1.bf16.msra.mxu0 0
    %669 = vmatprep.subr.bf16.mxu0 0
    %670 = vmatpush1.bf16.msra.mxu0 0
    %671 = vmatprep.subr.bf16.mxu0 0
    %672 = vmatpush1.bf16.msra.mxu0 0
    %673 = vmatprep.subr.bf16.mxu0 0
    %674 = vmatpush1.bf16.msra.mxu0 0
    %675 = vmatprep.subr.bf16.mxu0 0
    %676 = vmatpush1.bf16.msra.mxu0 0
    %677 = vmatprep.subr.bf16.mxu0 0
    %678 = vmatpush1.bf16.msra.mxu0 0
    %679 = vmatprep.subr.bf16.mxu0 0
    %680 = vmatpush1.bf16.msra.mxu0 0
    %681 = vmatprep.subr.bf16.mxu0 0
    %682 = vmatpush1.bf16.msra.mxu0 0
    %683 = vmatprep.mubr.bf16.mxu0 0
    %684 = vmatmul.mubr.bf16.gmra.mrb[0].mxu0 %v77
    %v685 = vpop.f32.mrb[0].mxu0
    %v686 = vadd.f32 0.0, %v685
    %v687 = vpop.f32.mrb[0].mxu0
    %v688 = vpop.f32.mrb[0].mxu0
    %v689 = vadd.f32 0.0, %v688
    %v690 = vpop.f32.mrb[0].mxu0
    %691 = vdwg.mxu0
    %v692 = vpack.c.bf16 %v689, %v686
    %693 = vst [vmem:[#allocation3 + $0x18] sm:$0xff] %v692
    %v694 = vld [vmem:[#allocation3] sm:$0xff]
    %v695 = vld [vmem:[#allocation3 + $0x8] sm:$0xff]
    %v696 = vld [vmem:[#allocation3 + $0x10] sm:$0xff]
    %v697 = vld [vmem:[#allocation3 + $0x18] sm:$0xff]
    %s698 = scalar_lea.vmem [#allocation9], 256
    %v699 = vld [vmem:[%s698] sm:$0xf]
    %v700 = vld [vmem:[%s698 + $0x4] sm:$0xf]
    %v701 = vld [vmem:[%s698 + $0x8] sm:$0xf]
    %v702 = vld [vmem:[%s698 + $0xc] sm:$0xf]
    %v703 = vld [vmem:[%s698 + $0x10] sm:$0xf]
    %v704 = vld [vmem:[%s698 + $0x14] sm:$0xf]
    %v705 = vld [vmem:[%s698 + $0x18] sm:$0xf]
    %v706 = vld [vmem:[%s698 + $0x1c] sm:$0xf]
    %v707 = vld [vmem:[%s698 + $0x20] sm:$0xf]
    %v708 = vld [vmem:[%s698 + $0x24] sm:$0xf]
    %v709 = vld [vmem:[%s698 + $0x28] sm:$0xf]
    %v710 = vld [vmem:[%s698 + $0x2c] sm:$0xf]
    %v711 = vld [vmem:[%s698 + $0x30] sm:$0xf]
    %v712 = vld [vmem:[%s698 + $0x34] sm:$0xf]
    %v713 = vld [vmem:[%s698 + $0x38] sm:$0xf]
    %v714 = vld [vmem:[%s698 + $0x3c] sm:$0xf]
    %v715 = vld [vmem:[%s698 + $0x40] sm:$0xf]
    %v716 = vld [vmem:[%s698 + $0x44] sm:$0xf]
    %v717 = vld [vmem:[%s698 + $0x48] sm:$0xf]
    %v718 = vld [vmem:[%s698 + $0x4c] sm:$0xf]
    %v719 = vld [vmem:[%s698 + $0x50] sm:$0xf]
    %v720 = vld [vmem:[%s698 + $0x54] sm:$0xf]
    %v721 = vld [vmem:[%s698 + $0x58] sm:$0xf]
    %v722 = vld [vmem:[%s698 + $0x5c] sm:$0xf]
    %v723 = vld [vmem:[%s698 + $0x60] sm:$0xf]
    %v724 = vld [vmem:[%s698 + $0x64] sm:$0xf]
    %v725 = vld [vmem:[%s698 + $0x68] sm:$0xf]
    %v726 = vld [vmem:[%s698 + $0x6c] sm:$0xf]
    %v727 = vld [vmem:[%s698 + $0x70] sm:$0xf]
    %v728 = vld [vmem:[%s698 + $0x74] sm:$0xf]
    %v729 = vld [vmem:[%s698 + $0x78] sm:$0xf]
    %v730 = vld [vmem:[%s698 + $0x7c] sm:$0xf]
    %v731 = vld [vmem:[%s698 + $0x80] sm:$0xf]
    %v732 = vld [vmem:[%s698 + $0x84] sm:$0xf]
    %v733 = vld [vmem:[%s698 + $0x88] sm:$0xf]
    %v734 = vld [vmem:[%s698 + $0x8c] sm:$0xf]
    %v735 = vld [vmem:[%s698 + $0x90] sm:$0xf]
    %v736 = vld [vmem:[%s698 + $0x94] sm:$0xf]
    %v737 = vld [vmem:[%s698 + $0x98] sm:$0xf]
    %v738 = vld [vmem:[%s698 + $0x9c] sm:$0xf]
    %v739 = vld [vmem:[%s698 + $0xa0] sm:$0xf]
    %v740 = vld [vmem:[%s698 + $0xa4] sm:$0xf]
    %v741 = vld [vmem:[%s698 + $0xa8] sm:$0xf]
    %v742 = vld [vmem:[%s698 + $0xac] sm:$0xf]
    %v743 = vld [vmem:[%s698 + $0xb0] sm:$0xf]
    %v744 = vld [vmem:[%s698 + $0xb4] sm:$0xf]
    %v745 = vld [vmem:[%s698 + $0xb8] sm:$0xf]
    %v746 = vld [vmem:[%s698 + $0xbc] sm:$0xf]
    %v747 = vld [vmem:[%s698 + $0xc0] sm:$0xf]
    %v748 = vld [vmem:[%s698 + $0xc4] sm:$0xf]
    %v749 = vld [vmem:[%s698 + $0xc8] sm:$0xf]
    %v750 = vld [vmem:[%s698 + $0xcc] sm:$0xf]
    %v751 = vld [vmem:[%s698 + $0xd0] sm:$0xf]
    %v752 = vld [vmem:[%s698 + $0xd4] sm:$0xf]
    %v753 = vld [vmem:[%s698 + $0xd8] sm:$0xf]
    %v754 = vld [vmem:[%s698 + $0xdc] sm:$0xf]
    %v755 = vld [vmem:[%s698 + $0xe0] sm:$0xf]
    %v756 = vld [vmem:[%s698 + $0xe4] sm:$0xf]
    %v757 = vld [vmem:[%s698 + $0xe8] sm:$0xf]
    %v758 = vld [vmem:[%s698 + $0xec] sm:$0xf]
    %v759 = vld [vmem:[%s698 + $0xf0] sm:$0xf]
    %v760 = vld [vmem:[%s698 + $0xf4] sm:$0xf]
    %v761 = vld [vmem:[%s698 + $0xf8] sm:$0xf]
    %v762 = vld [vmem:[%s698 + $0xfc] sm:$0xf]
    %s763 = scalar_lea.vmem %s3, 1
    %v764 = vld [vmem:[%s763] sm:$0x1]
    %v766 = vlaneseq
    %v767 = vshrl.u32 %v766, 7
    %v768 = vsub.s32 0, %v767
    %v769 = vrot.slane %v764, %v768
    %v835 = vunpack.c.l.b16 %v699
    %v836 = vunpack.c.l.b16 %v700
    %v837 = vunpack.c.l.b16 %v701
    %v838 = vunpack.c.l.b16 %v702
    %v839 = vunpack.c.l.b16 %v703
    %v840 = vunpack.c.l.b16 %v704
    %v841 = vunpack.c.l.b16 %v705
    %v842 = vunpack.c.l.b16 %v706
    %v843 = vunpack.c.l.b16 %v707
    %v844 = vunpack.c.l.b16 %v708
    %v845 = vunpack.c.l.b16 %v709
    %v846 = vunpack.c.l.b16 %v710
    %v847 = vunpack.c.l.b16 %v711
    %v848 = vunpack.c.l.b16 %v712
    %v849 = vunpack.c.l.b16 %v713
    %v850 = vunpack.c.l.b16 %v714
    %v851 = vunpack.c.l.b16 %v715
    %v852 = vunpack.c.l.b16 %v716
    %v853 = vunpack.c.l.b16 %v717
    %v854 = vunpack.c.l.b16 %v718
    %v855 = vunpack.c.l.b16 %v719
    %v856 = vunpack.c.l.b16 %v720
    %v857 = vunpack.c.l.b16 %v721
    %v858 = vunpack.c.l.b16 %v722
    %v859 = vunpack.c.l.b16 %v723
    %v860 = vunpack.c.l.b16 %v724
    %v861 = vunpack.c.l.b16 %v725
    %v862 = vunpack.c.l.b16 %v726
    %v863 = vunpack.c.l.b16 %v727
    %v864 = vunpack.c.l.b16 %v728
    %v865 = vunpack.c.l.b16 %v729
    %v866 = vunpack.c.l.b16 %v730
    %v867 = vunpack.c.l.b16 %v731
    %v868 = vunpack.c.l.b16 %v732
    %v869 = vunpack.c.l.b16 %v733
    %v870 = vunpack.c.l.b16 %v734
    %v871 = vunpack.c.l.b16 %v735
    %v872 = vunpack.c.l.b16 %v736
    %v873 = vunpack.c.l.b16 %v737
    %v874 = vunpack.c.l.b16 %v738
    %v875 = vunpack.c.l.b16 %v739
    %v876 = vunpack.c.l.b16 %v740
    %v877 = vunpack.c.l.b16 %v741
    %v878 = vunpack.c.l.b16 %v742
    %v879 = vunpack.c.l.b16 %v743
    %v880 = vunpack.c.l.b16 %v744
    %v881 = vunpack.c.l.b16 %v745
    %v882 = vunpack.c.l.b16 %v746
    %v883 = vunpack.c.l.b16 %v747
    %v884 = vunpack.c.l.b16 %v748
    %v885 = vunpack.c.l.b16 %v749
    %v886 = vunpack.c.l.b16 %v750
    %v887 = vunpack.c.l.b16 %v751
    %v888 = vunpack.c.l.b16 %v752
    %v889 = vunpack.c.l.b16 %v753
    %v890 = vunpack.c.l.b16 %v754
    %v891 = vunpack.c.l.b16 %v755
    %v892 = vunpack.c.l.b16 %v756
    %v893 = vunpack.c.l.b16 %v757
    %v894 = vunpack.c.l.b16 %v758
    %v895 = vunpack.c.l.b16 %v759
    %v896 = vunpack.c.l.b16 %v760
    %v897 = vunpack.c.l.b16 %v761
    %v898 = vunpack.c.l.b16 %v762
    %v899 = vpack.c.b16 %v836, %v835
    %v900 = vpack.c.b16 %v838, %v837
    %v901 = vpack.c.b16 %v840, %v839
    %v902 = vpack.c.b16 %v842, %v841
    %v903 = vpack.c.b16 %v844, %v843
    %v904 = vpack.c.b16 %v846, %v845
    %v905 = vpack.c.b16 %v848, %v847
    %v906 = vpack.c.b16 %v850, %v849
    %v907 = vpack.c.b16 %v852, %v851
    %v908 = vpack.c.b16 %v854, %v853
    %v909 = vpack.c.b16 %v856, %v855
    %v910 = vpack.c.b16 %v858, %v857
    %v911 = vpack.c.b16 %v860, %v859
    %v912 = vpack.c.b16 %v862, %v861
    %v913 = vpack.c.b16 %v864, %v863
    %v914 = vpack.c.b16 %v866, %v865
    %v915 = vpack.c.b16 %v868, %v867
    %v916 = vpack.c.b16 %v870, %v869
    %v917 = vpack.c.b16 %v872, %v871
    %v918 = vpack.c.b16 %v874, %v873
    %v919 = vpack.c.b16 %v876, %v875
    %v920 = vpack.c.b16 %v878, %v877
    %v921 = vpack.c.b16 %v880, %v879
    %v922 = vpack.c.b16 %v882, %v881
    %v923 = vpack.c.b16 %v884, %v883
    %v924 = vpack.c.b16 %v886, %v885
    %v925 = vpack.c.b16 %v888, %v887
    %v926 = vpack.c.b16 %v890, %v889
    %v927 = vpack.c.b16 %v892, %v891
    %v928 = vpack.c.b16 %v894, %v893
    %v929 = vpack.c.b16 %v896, %v895
    %v930 = vpack.c.b16 %v898, %v897
    %963 = vmatprep.subr.bf16.mxu0 0
    %964 = vmatpush1.bf16.msra.mxu0 %v899
    %965 = vmatprep.subr.bf16.mxu0 0
    %966 = vmatpush1.bf16.msra.mxu0 %v900
    %967 = vmatprep.subr.bf16.mxu0 0
    %968 = vmatpush1.bf16.msra.mxu0 %v901
    %969 = vmatprep.subr.bf16.mxu0 0
    %970 = vmatpush1.bf16.msra.mxu0 %v902
    %971 = vmatprep.subr.bf16.mxu0 0
    %972 = vmatpush1.bf16.msra.mxu0 %v903
    %973 = vmatprep.subr.bf16.mxu0 0
    %974 = vmatpush1.bf16.msra.mxu0 %v904
    %975 = vmatprep.subr.bf16.mxu0 0
    %976 = vmatpush1.bf16.msra.mxu0 %v905
    %977 = vmatprep.subr.bf16.mxu0 0
    %978 = vmatpush1.bf16.msra.mxu0 %v906
    %979 = vmatprep.subr.bf16.mxu0 0
    %980 = vmatpush1.bf16.msra.mxu0 %v907
    %981 = vmatprep.subr.bf16.mxu0 0
    %982 = vmatpush1.bf16.msra.mxu0 %v908
    %983 = vmatprep.subr.bf16.mxu0 0
    %984 = vmatpush1.bf16.msra.mxu0 %v909
    %985 = vmatprep.subr.bf16.mxu0 0
    %986 = vmatpush1.bf16.msra.mxu0 %v910
    %987 = vmatprep.subr.bf16.mxu0 0
    %988 = vmatpush1.bf16.msra.mxu0 %v911
    %989 = vmatprep.subr.bf16.mxu0 0
    %990 = vmatpush1.bf16.msra.mxu0 %v912
    %991 = vmatprep.subr.bf16.mxu0 0
    %992 = vmatpush1.bf16.msra.mxu0 %v913
    %993 = vmatprep.subr.bf16.mxu0 0
    %994 = vmatpush1.bf16.msra.mxu0 %v914
    %995 = vmatprep.mubr.bf16.mxu0 %v695
    %996 = vmatmul.mubr.bf16.gmra.mrb[0].mxu0 %v694
    %v997 = vpop.f32.mrb[0].mxu0
    %v998 = vadd.f32 %v769, %v997
    %v999 = vpop.f32.mrb[0].mxu0
    %v1000 = vpop.f32.mrb[0].mxu0
    %v1001 = vadd.f32 %v769, %v1000
    %v1002 = vpop.f32.mrb[0].mxu0
    %1003 = vdwg.mxu0
    %1004 = vmatprep.subr.bf16.mxu0 0
    %1005 = vmatpush1.bf16.msra.mxu0 %v915
    %1006 = vmatprep.subr.bf16.mxu0 0
    %1007 = vmatpush1.bf16.msra.mxu0 %v916
    %1008 = vmatprep.subr.bf16.mxu0 0
    %1009 = vmatpush1.bf16.msra.mxu0 %v917
    %1010 = vmatprep.subr.bf16.mxu0 0
    %1011 = vmatpush1.bf16.msra.mxu0 %v918
    %1012 = vmatprep.subr.bf16.mxu0 0
    %1013 = vmatpush1.bf16.msra.mxu0 %v919
    %1014 = vmatprep.subr.bf16.mxu0 0
    %1015 = vmatpush1.bf16.msra.mxu0 %v920
    %1016 = vmatprep.subr.bf16.mxu0 0
    %1017 = vmatpush1.bf16.msra.mxu0 %v921
    %1018 = vmatprep.subr.bf16.mxu0 0
    %1019 = vmatpush1.bf16.msra.mxu0 %v922
    %1020 = vmatprep.subr.bf16.mxu0 0
    %1021 = vmatpush1.bf16.msra.mxu0 %v923
    %1022 = vmatprep.subr.bf16.mxu0 0
    %1023 = vmatpush1.bf16.msra.mxu0 %v924
    %1024 = vmatprep.subr.bf16.mxu0 0
    %1025 = vmatpush1.bf16.msra.mxu0 %v925
    %1026 = vmatprep.subr.bf16.mxu0 0
    %1027 = vmatpush1.bf16.msra.mxu0 %v926
    %1028 = vmatprep.subr.bf16.mxu0 0
    %1029 = vmatpush1.bf16.msra.mxu0 %v927
    %1030 = vmatprep.subr.bf16.mxu0 0
    %1031 = vmatpush1.bf16.msra.mxu0 %v928
    %1032 = vmatprep.subr.bf16.mxu0 0
    %1033 = vmatpush1.bf16.msra.mxu0 %v929
    %1034 = vmatprep.subr.bf16.mxu0 0
    %1035 = vmatpush1.bf16.msra.mxu0 %v930
    %1036 = vmatprep.mubr.bf16.mxu0 %v697
    %1037 = vmatmul.mubr.bf16.gmra.mrb[0].mxu0 %v696
    %v1038 = vpop.f32.mrb[0].mxu0
    %v1039 = vadd.f32 %v998, %v1038
    %v1040 = vpop.f32.mrb[0].mxu0
    %v1041 = vpop.f32.mrb[0].mxu0
    %v1042 = vadd.f32 %v1001, %v1041
    %v1043 = vpop.f32.mrb[0].mxu0
    %1044 = vdwg.mxu0
    %v1045 = vmax.f32 %v1039, 0.0
    %v1046 = vmax.f32 %v1042, 0.0
    %1047 = vst [vmem:[#allocation2] sm:$0xff] %v1045
    %1048 = vst [vmem:[#allocation2 + $0x8] sm:$0xff] %v1046
    %v1049 = vld [vmem:[#allocation2] sm:$0xff]
    %v1050 = vld [vmem:[#allocation2 + $0x8] sm:$0xff]
    %v1051 = vpack.c.bf16 %v1050, %v1049
    %1052 = vst [vmem:[#allocation3] sm:$0xff] %v1051
    %1053 = vmatprep.subr.bf16.mxu0 0
    %1054 = vmatpush1.bf16.msra.mxu0 %v1051
    %1055 = vmatprep.subr.bf16.mxu0 0
    %1056 = vmatpush1.bf16.msra.mxu0 0
    %1057 = vmatprep.subr.bf16.mxu0 0
    %1058 = vmatpush1.bf16.msra.mxu0 0
    %1059 = vmatprep.subr.bf16.mxu0 0
    %1060 = vmatpush1.bf16.msra.mxu0 0
    %1061 = vmatprep.subr.bf16.mxu0 0
    %1062 = vmatpush1.bf16.msra.mxu0 0
    %1063 = vmatprep.subr.bf16.mxu0 0
    %1064 = vmatpush1.bf16.msra.mxu0 0
    %1065 = vmatprep.subr.bf16.mxu0 0
    %1066 = vmatpush1.bf16.msra.mxu0 0
    %1067 = vmatprep.subr.bf16.mxu0 0
    %1068 = vmatpush1.bf16.msra.mxu0 0
    %1069 = vmatprep.subr.bf16.mxu0 0
    %1070 = vmatpush1.bf16.msra.mxu0 0
    %1071 = vmatprep.subr.bf16.mxu0 0
    %1072 = vmatpush1.bf16.msra.mxu0 0
    %1073 = vmatprep.subr.bf16.mxu0 0
    %1074 = vmatpush1.bf16.msra.mxu0 0
    %1075 = vmatprep.subr.bf16.mxu0 0
    %1076 = vmatpush1.bf16.msra.mxu0 0
    %1077 = vmatprep.subr.bf16.mxu0 0
    %1078 = vmatpush1.bf16.msra.mxu0 0
    %1079 = vmatprep.subr.bf16.mxu0 0
    %1080 = vmatpush1.bf16.msra.mxu0 0
    %1081 = vmatprep.subr.bf16.mxu0 0
    %1082 = vmatpush1.bf16.msra.mxu0 0
    %1083 = vmatprep.subr.bf16.mxu0 0
    %1084 = vmatpush1.bf16.msra.mxu0 0
    %1085 = vmatprep.mubr.bf16.mxu0 0
    %1086 = vmatmul.mubr.bf16.gmra.mrb[0].mxu0 %v77
    %v1087 = vpop.f32.mrb[0].mxu0
    %v1088 = vadd.f32 0.0, %v1087
    %v1089 = vpop.f32.mrb[0].mxu0
    %v1090 = vpop.f32.mrb[0].mxu0
    %v1091 = vadd.f32 0.0, %v1090
    %v1092 = vpop.f32.mrb[0].mxu0
    %1093 = vdwg.mxu0
    %v1094 = vpack.c.bf16 %v1091, %v1088
    %1095 = vst [vmem:[#allocation3 + $0x8] sm:$0xff] %v1094
    %1096 = vmatprep.subr.bf16.mxu0 0
    %1097 = vmatpush1.bf16.msra.mxu0 %v1094
    %1098 = vmatprep.subr.bf16.mxu0 0
    %1099 = vmatpush1.bf16.msra.mxu0 0
    %1100 = vmatprep.subr.bf16.mxu0 0
    %1101 = vmatpush1.bf16.msra.mxu0 0
    %1102 = vmatprep.subr.bf16.mxu0 0
    %1103 = vmatpush1.bf16.msra.mxu0 0
    %1104 = vmatprep.subr.bf16.mxu0 0
    %1105 = vmatpush1.bf16.msra.mxu0 0
    %1106 = vmatprep.subr.bf16.mxu0 0
    %1107 = vmatpush1.bf16.msra.mxu0 0
    %1108 = vmatprep.subr.bf16.mxu0 0
    %1109 = vmatpush1.bf16.msra.mxu0 0
    %1110 = vmatprep.subr.bf16.mxu0 0
    %1111 = vmatpush1.bf16.msra.mxu0 0
    %1112 = vmatprep.subr.bf16.mxu0 0
    %1113 = vmatpush1.bf16.msra.mxu0 0
    %1114 = vmatprep.subr.bf16.mxu0 0
    %1115 = vmatpush1.bf16.msra.mxu0 0
    %1116 = vmatprep.subr.bf16.mxu0 0
    %1117 = vmatpush1.bf16.msra.mxu0 0
    %1118 = vmatprep.subr.bf16.mxu0 0
    %1119 = vmatpush1.bf16.msra.mxu0 0
    %1120 = vmatprep.subr.bf16.mxu0 0
    %1121 = vmatpush1.bf16.msra.mxu0 0
    %1122 = vmatprep.subr.bf16.mxu0 0
    %1123 = vmatpush1.bf16.msra.mxu0 0
    %1124 = vmatprep.subr.bf16.mxu0 0
    %1125 = vmatpush1.bf16.msra.mxu0 0
    %1126 = vmatprep.subr.bf16.mxu0 0
    %1127 = vmatpush1.bf16.msra.mxu0 0
    %1128 = vmatprep.mubr.bf16.mxu0 0
    %1129 = vmatmul.mubr.bf16.gmra.mrb[0].mxu0 %v77
    %v1130 = vpop.f32.mrb[0].mxu0
    %v1131 = vadd.f32 0.0, %v1130
    %v1132 = vpop.f32.mrb[0].mxu0
    %v1133 = vpop.f32.mrb[0].mxu0
    %v1134 = vadd.f32 0.0, %v1133
    %v1135 = vpop.f32.mrb[0].mxu0
    %1136 = vdwg.mxu0
    %v1137 = vpack.c.bf16 %v1134, %v1131
    %1138 = vst [vmem:[#allocation3 + $0x10] sm:$0xff] %v1137
    %1139 = vmatprep.subr.bf16.mxu0 0
    %1140 = vmatpush1.bf16.msra.mxu0 %v1137
    %1141 = vmatprep.subr.bf16.mxu0 0
    %1142 = vmatpush1.bf16.msra.mxu0 0
    %1143 = vmatprep.subr.bf16.mxu0 0
    %1144 = vmatpush1.bf16.msra.mxu0 0
    %1145 = vmatprep.subr.bf16.mxu0 0
    %1146 = vmatpush1.bf16.msra.mxu0 0
    %1147 = vmatprep.subr.bf16.mxu0 0
    %1148 = vmatpush1.bf16.msra.mxu0 0
    %1149 = vmatprep.subr.bf16.mxu0 0
    %1150 = vmatpush1.bf16.msra.mxu0 0
    %1151 = vmatprep.subr.bf16.mxu0 0
    %1152 = vmatpush1.bf16.msra.mxu0 0
    %1153 = vmatprep.subr.bf16.mxu0 0
    %1154 = vmatpush1.bf16.msra.mxu0 0
    %1155 = vmatprep.subr.bf16.mxu0 0
    %1156 = vmatpush1.bf16.msra.mxu0 0
    %1157 = vmatprep.subr.bf16.mxu0 0
    %1158 = vmatpush1.bf16.msra.mxu0 0
    %1159 = vmatprep.subr.bf16.mxu0 0
    %1160 = vmatpush1.bf16.msra.mxu0 0
    %1161 = vmatprep.subr.bf16.mxu0 0
    %1162 = vmatpush1.bf16.msra.mxu0 0
    %1163 = vmatprep.subr.bf16.mxu0 0
    %1164 = vmatpush1.bf16.msra.mxu0 0
    %1165 = vmatprep.subr.bf16.mxu0 0
    %1166 = vmatpush1.bf16.msra.mxu0 0
    %1167 = vmatprep.subr.bf16.mxu0 0
    %1168 = vmatpush1.bf16.msra.mxu0 0
    %1169 = vmatprep.subr.bf16.mxu0 0
    %1170 = vmatpush1.bf16.msra.mxu0 0
    %1171 = vmatprep.mubr.bf16.mxu0 0
    %1172 = vmatmul.mubr.bf16.gmra.mrb[0].mxu0 %v77
    %v1173 = vpop.f32.mrb[0].mxu0
    %v1174 = vadd.f32 0.0, %v1173
    %v1175 = vpop.f32.mrb[0].mxu0
    %v1176 = vpop.f32.mrb[0].mxu0
    %v1177 = vadd.f32 0.0, %v1176
    %v1178 = vpop.f32.mrb[0].mxu0
    %1179 = vdwg.mxu0
    %v1180 = vpack.c.bf16 %v1177, %v1174
    %1181 = vst [vmem:[#allocation3 + $0x18] sm:$0xff] %v1180
    %v1182 = vld [vmem:[#allocation3] sm:$0xff]
    %v1183 = vld [vmem:[#allocation3 + $0x8] sm:$0xff]
    %v1184 = vld [vmem:[#allocation3 + $0x10] sm:$0xff]
    %v1185 = vld [vmem:[#allocation3 + $0x18] sm:$0xff]
    %s1186 = scalar_lea.vmem [#allocation9], 512
    %v1187 = vld [vmem:[%s1186] sm:$0xf]
    %v1188 = vld [vmem:[%s1186 + $0x4] sm:$0xf]
    %v1189 = vld [vmem:[%s1186 + $0x8] sm:$0xf]
    %v1190 = vld [vmem:[%s1186 + $0xc] sm:$0xf]
    %v1191 = vld [vmem:[%s1186 + $0x10] sm:$0xf]
    %v1192 = vld [vmem:[%s1186 + $0x14] sm:$0xf]
    %v1193 = vld [vmem:[%s1186 + $0x18] sm:$0xf]
    %v1194 = vld [vmem:[%s1186 + $0x1c] sm:$0xf]
    %v1195 = vld [vmem:[%s1186 + $0x20] sm:$0xf]
    %v1196 = vld [vmem:[%s1186 + $0x24] sm:$0xf]
    %v1197 = vld [vmem:[%s1186 + $0x28] sm:$0xf]
    %v1198 = vld [vmem:[%s1186 + $0x2c] sm:$0xf]
    %v1199 = vld [vmem:[%s1186 + $0x30] sm:$0xf]
    %v1200 = vld [vmem:[%s1186 + $0x34] sm:$0xf]
    %v1201 = vld [vmem:[%s1186 + $0x38] sm:$0xf]
    %v1202 = vld [vmem:[%s1186 + $0x3c] sm:$0xf]
    %v1203 = vld [vmem:[%s1186 + $0x40] sm:$0xf]
    %v1204 = vld [vmem:[%s1186 + $0x44] sm:$0xf]
    %v1205 = vld [vmem:[%s1186 + $0x48] sm:$0xf]
    %v1206 = vld [vmem:[%s1186 + $0x4c] sm:$0xf]
    %v1207 = vld [vmem:[%s1186 + $0x50] sm:$0xf]
    %v1208 = vld [vmem:[%s1186 + $0x54] sm:$0xf]
    %v1209 = vld [vmem:[%s1186 + $0x58] sm:$0xf]
    %v1210 = vld [vmem:[%s1186 + $0x5c] sm:$0xf]
    %v1211 = vld [vmem:[%s1186 + $0x60] sm:$0xf]
    %v1212 = vld [vmem:[%s1186 + $0x64] sm:$0xf]
    %v1213 = vld [vmem:[%s1186 + $0x68] sm:$0xf]
    %v1214 = vld [vmem:[%s1186 + $0x6c] sm:$0xf]
    %v1215 = vld [vmem:[%s1186 + $0x70] sm:$0xf]
    %v1216 = vld [vmem:[%s1186 + $0x74] sm:$0xf]
    %v1217 = vld [vmem:[%s1186 + $0x78] sm:$0xf]
    %v1218 = vld [vmem:[%s1186 + $0x7c] sm:$0xf]
    %v1219 = vld [vmem:[%s1186 + $0x80] sm:$0xf]
    %v1220 = vld [vmem:[%s1186 + $0x84] sm:$0xf]
    %v1221 = vld [vmem:[%s1186 + $0x88] sm:$0xf]
    %v1222 = vld [vmem:[%s1186 + $0x8c] sm:$0xf]
    %v1223 = vld [vmem:[%s1186 + $0x90] sm:$0xf]
    %v1224 = vld [vmem:[%s1186 + $0x94] sm:$0xf]
    %v1225 = vld [vmem:[%s1186 + $0x98] sm:$0xf]
    %v1226 = vld [vmem:[%s1186 + $0x9c] sm:$0xf]
    %v1227 = vld [vmem:[%s1186 + $0xa0] sm:$0xf]
    %v1228 = vld [vmem:[%s1186 + $0xa4] sm:$0xf]
    %v1229 = vld [vmem:[%s1186 + $0xa8] sm:$0xf]
    %v1230 = vld [vmem:[%s1186 + $0xac] sm:$0xf]
    %v1231 = vld [vmem:[%s1186 + $0xb0] sm:$0xf]
    %v1232 = vld [vmem:[%s1186 + $0xb4] sm:$0xf]
    %v1233 = vld [vmem:[%s1186 + $0xb8] sm:$0xf]
    %v1234 = vld [vmem:[%s1186 + $0xbc] sm:$0xf]
    %v1235 = vld [vmem:[%s1186 + $0xc0] sm:$0xf]
    %v1236 = vld [vmem:[%s1186 + $0xc4] sm:$0xf]
    %v1237 = vld [vmem:[%s1186 + $0xc8] sm:$0xf]
    %v1238 = vld [vmem:[%s1186 + $0xcc] sm:$0xf]
    %v1239 = vld [vmem:[%s1186 + $0xd0] sm:$0xf]
    %v1240 = vld [vmem:[%s1186 + $0xd4] sm:$0xf]
    %v1241 = vld [vmem:[%s1186 + $0xd8] sm:$0xf]
    %v1242 = vld [vmem:[%s1186 + $0xdc] sm:$0xf]
    %v1243 = vld [vmem:[%s1186 + $0xe0] sm:$0xf]
    %v1244 = vld [vmem:[%s1186 + $0xe4] sm:$0xf]
    %v1245 = vld [vmem:[%s1186 + $0xe8] sm:$0xf]
    %v1246 = vld [vmem:[%s1186 + $0xec] sm:$0xf]
    %v1247 = vld [vmem:[%s1186 + $0xf0] sm:$0xf]
    %v1248 = vld [vmem:[%s1186 + $0xf4] sm:$0xf]
    %v1249 = vld [vmem:[%s1186 + $0xf8] sm:$0xf]
    %v1250 = vld [vmem:[%s1186 + $0xfc] sm:$0xf]
    %s1251 = scalar_lea.vmem %s3, 2
    %v1252 = vld [vmem:[%s1251] sm:$0x1]
    %v1254 = vlaneseq
    %v1255 = vshrl.u32 %v1254, 7
    %v1256 = vsub.s32 0, %v1255
    %v1257 = vrot.slane %v1252, %v1256
    %v1323 = vunpack.c.l.b16 %v1187
    %v1324 = vunpack.c.l.b16 %v1188
    %v1325 = vunpack.c.l.b16 %v1189
    %v1326 = vunpack.c.l.b16 %v1190
    %v1327 = vunpack.c.l.b16 %v1191
    %v1328 = vunpack.c.l.b16 %v1192
    %v1329 = vunpack.c.l.b16 %v1193
    %v1330 = vunpack.c.l.b16 %v1194
    %v1331 = vunpack.c.l.b16 %v1195
    %v1332 = vunpack.c.l.b16 %v1196
    %v1333 = vunpack.c.l.b16 %v1197
    %v1334 = vunpack.c.l.b16 %v1198
    %v1335 = vunpack.c.l.b16 %v1199
    %v1336 = vunpack.c.l.b16 %v1200
    %v1337 = vunpack.c.l.b16 %v1201
    %v1338 = vunpack.c.l.b16 %v1202
    %v1339 = vunpack.c.l.b16 %v1203
    %v1340 = vunpack.c.l.b16 %v1204
    %v1341 = vunpack.c.l.b16 %v1205
    %v1342 = vunpack.c.l.b16 %v1206
    %v1343 = vunpack.c.l.b16 %v1207
    %v1344 = vunpack.c.l.b16 %v1208
    %v1345 = vunpack.c.l.b16 %v1209
    %v1346 = vunpack.c.l.b16 %v1210
    %v1347 = vunpack.c.l.b16 %v1211
    %v1348 = vunpack.c.l.b16 %v1212
    %v1349 = vunpack.c.l.b16 %v1213
    %v1350 = vunpack.c.l.b16 %v1214
    %v1351 = vunpack.c.l.b16 %v1215
    %v1352 = vunpack.c.l.b16 %v1216
    %v1353 = vunpack.c.l.b16 %v1217
    %v1354 = vunpack.c.l.b16 %v1218
    %v1355 = vunpack.c.l.b16 %v1219
    %v1356 = vunpack.c.l.b16 %v1220
    %v1357 = vunpack.c.l.b16 %v1221
    %v1358 = vunpack.c.l.b16 %v1222
    %v1359 = vunpack.c.l.b16 %v1223
    %v1360 = vunpack.c.l.b16 %v1224
    %v1361 = vunpack.c.l.b16 %v1225
    %v1362 = vunpack.c.l.b16 %v1226
    %v1363 = vunpack.c.l.b16 %v1227
    %v1364 = vunpack.c.l.b16 %v1228
    %v1365 = vunpack.c.l.b16 %v1229
    %v1366 = vunpack.c.l.b16 %v1230
    %v1367 = vunpack.c.l.b16 %v1231
    %v1368 = vunpack.c.l.b16 %v1232
    %v1369 = vunpack.c.l.b16 %v1233
    %v1370 = vunpack.c.l.b16 %v1234
    %v1371 = vunpack.c.l.b16 %v1235
    %v1372 = vunpack.c.l.b16 %v1236
    %v1373 = vunpack.c.l.b16 %v1237
    %v1374 = vunpack.c.l.b16 %v1238
    %v1375 = vunpack.c.l.b16 %v1239
    %v1376 = vunpack.c.l.b16 %v1240
    %v1377 = vunpack.c.l.b16 %v1241
    %v1378 = vunpack.c.l.b16 %v1242
    %v1379 = vunpack.c.l.b16 %v1243
    %v1380 = vunpack.c.l.b16 %v1244
    %v1381 = vunpack.c.l.b16 %v1245
    %v1382 = vunpack.c.l.b16 %v1246
    %v1383 = vunpack.c.l.b16 %v1247
    %v1384 = vunpack.c.l.b16 %v1248
    %v1385 = vunpack.c.l.b16 %v1249
    %v1386 = vunpack.c.l.b16 %v1250
    %v1387 = vpack.c.b16 %v1324, %v1323
    %v1388 = vpack.c.b16 %v1326, %v1325
    %v1389 = vpack.c.b16 %v1328, %v1327
    %v1390 = vpack.c.b16 %v1330, %v1329
    %v1391 = vpack.c.b16 %v1332, %v1331
    %v1392 = vpack.c.b16 %v1334, %v1333
    %v1393 = vpack.c.b16 %v1336, %v1335
    %v1394 = vpack.c.b16 %v1338, %v1337
    %v1395 = vpack.c.b16 %v1340, %v1339
    %v1396 = vpack.c.b16 %v1342, %v1341
    %v1397 = vpack.c.b16 %v1344, %v1343
    %v1398 = vpack.c.b16 %v1346, %v1345
    %v1399 = vpack.c.b16 %v1348, %v1347
    %v1400 = vpack.c.b16 %v1350, %v1349
    %v1401 = vpack.c.b16 %v1352, %v1351
    %v1402 = vpack.c.b16 %v1354, %v1353
    %v1403 = vpack.c.b16 %v1356, %v1355
    %v1404 = vpack.c.b16 %v1358, %v1357
    %v1405 = vpack.c.b16 %v1360, %v1359
    %v1406 = vpack.c.b16 %v1362, %v1361
    %v1407 = vpack.c.b16 %v1364, %v1363
    %v1408 = vpack.c.b16 %v1366, %v1365
    %v1409 = vpack.c.b16 %v1368, %v1367
    %v1410 = vpack.c.b16 %v1370, %v1369
    %v1411 = vpack.c.b16 %v1372, %v1371
    %v1412 = vpack.c.b16 %v1374, %v1373
    %v1413 = vpack.c.b16 %v1376, %v1375
    %v1414 = vpack.c.b16 %v1378, %v1377
    %v1415 = vpack.c.b16 %v1380, %v1379
    %v1416 = vpack.c.b16 %v1382, %v1381
    %v1417 = vpack.c.b16 %v1384, %v1383
    %v1418 = vpack.c.b16 %v1386, %v1385
    %1451 = vmatprep.subr.bf16.mxu0 0
    %1452 = vmatpush1.bf16.msra.mxu0 %v1387
    %1453 = vmatprep.subr.bf16.mxu0 0
    %1454 = vmatpush1.bf16.msra.mxu0 %v1388
    %1455 = vmatprep.subr.bf16.mxu0 0
    %1456 = vmatpush1.bf16.msra.mxu0 %v1389
    %1457 = vmatprep.subr.bf16.mxu0 0
    %1458 = vmatpush1.bf16.msra.mxu0 %v1390
    %1459 = vmatprep.subr.bf16.mxu0 0
    %1460 = vmatpush1.bf16.msra.mxu0 %v1391
    %1461 = vmatprep.subr.bf16.mxu0 0
    %1462 = vmatpush1.bf16.msra.mxu0 %v1392
    %1463 = vmatprep.subr.bf16.mxu0 0
    %1464 = vmatpush1.bf16.msra.mxu0 %v1393
    %1465 = vmatprep.subr.bf16.mxu0 0
    %1466 = vmatpush1.bf16.msra.mxu0 %v1394
    %1467 = vmatprep.subr.bf16.mxu0 0
    %1468 = vmatpush1.bf16.msra.mxu0 %v1395
    %1469 = vmatprep.subr.bf16.mxu0 0
    %1470 = vmatpush1.bf16.msra.mxu0 %v1396
    %1471 = vmatprep.subr.bf16.mxu0 0
    %1472 = vmatpush1.bf16.msra.mxu0 %v1397
    %1473 = vmatprep.subr.bf16.mxu0 0
    %1474 = vmatpush1.bf16.msra.mxu0 %v1398
    %1475 = vmatprep.subr.bf16.mxu0 0
    %1476 = vmatpush1.bf16.msra.mxu0 %v1399
    %1477 = vmatprep.subr.bf16.mxu0 0
    %1478 = vmatpush1.bf16.msra.mxu0 %v1400
    %1479 = vmatprep.subr.bf16.mxu0 0
    %1480 = vmatpush1.bf16.msra.mxu0 %v1401
    %1481 = vmatprep.subr.bf16.mxu0 0
    %1482 = vmatpush1.bf16.msra.mxu0 %v1402
    %1483 = vmatprep.mubr.bf16.mxu0 %v1183
    %1484 = vmatmul.mubr.bf16.gmra.mrb[0].mxu0 %v1182
    %v1485 = vpop.f32.mrb[0].mxu0
    %v1486 = vadd.f32 %v1257, %v1485
    %v1487 = vpop.f32.mrb[0].mxu0
    %v1488 = vpop.f32.mrb[0].mxu0
    %v1489 = vadd.f32 %v1257, %v1488
    %v1490 = vpop.f32.mrb[0].mxu0
    %1491 = vdwg.mxu0
    %1492 = vmatprep.subr.bf16.mxu0 0
    %1493 = vmatpush1.bf16.msra.mxu0 %v1403
    %1494 = vmatprep.subr.bf16.mxu0 0
    %1495 = vmatpush1.bf16.msra.mxu0 %v1404
    %1496 = vmatprep.subr.bf16.mxu0 0
    %1497 = vmatpush1.bf16.msra.mxu0 %v1405
    %1498 = vmatprep.subr.bf16.mxu0 0
    %1499 = vmatpush1.bf16.msra.mxu0 %v1406
    %1500 = vmatprep.subr.bf16.mxu0 0
    %1501 = vmatpush1.bf16.msra.mxu0 %v1407
    %1502 = vmatprep.subr.bf16.mxu0 0
    %1503 = vmatpush1.bf16.msra.mxu0 %v1408
    %1504 = vmatprep.subr.bf16.mxu0 0
    %1505 = vmatpush1.bf16.msra.mxu0 %v1409
    %1506 = vmatprep.subr.bf16.mxu0 0
    %1507 = vmatpush1.bf16.msra.mxu0 %v1410
    %1508 = vmatprep.subr.bf16.mxu0 0
    %1509 = vmatpush1.bf16.msra.mxu0 %v1411
    %1510 = vmatprep.subr.bf16.mxu0 0
    %1511 = vmatpush1.bf16.msra.mxu0 %v1412
    %1512 = vmatprep.subr.bf16.mxu0 0
    %1513 = vmatpush1.bf16.msra.mxu0 %v1413
    %1514 = vmatprep.subr.bf16.mxu0 0
    %1515 = vmatpush1.bf16.msra.mxu0 %v1414
    %1516 = vmatprep.subr.bf16.mxu0 0
    %1517 = vmatpush1.bf16.msra.mxu0 %v1415
    %1518 = vmatprep.subr.bf16.mxu0 0
    %1519 = vmatpush1.bf16.msra.mxu0 %v1416
    %1520 = vmatprep.subr.bf16.mxu0 0
    %1521 = vmatpush1.bf16.msra.mxu0 %v1417
    %1522 = vmatprep.subr.bf16.mxu0 0
    %1523 = vmatpush1.bf16.msra.mxu0 %v1418
    %1524 = vmatprep.mubr.bf16.mxu0 %v1185
    %1525 = vmatmul.mubr.bf16.gmra.mrb[0].mxu0 %v1184
    %v1526 = vpop.f32.mrb[0].mxu0
    %v1527 = vadd.f32 %v1486, %v1526
    %v1528 = vpop.f32.mrb[0].mxu0
    %v1529 = vpop.f32.mrb[0].mxu0
    %v1530 = vadd.f32 %v1489, %v1529
    %v1531 = vpop.f32.mrb[0].mxu0
    %1532 = vdwg.mxu0
    %v1533 = vtanh.pop %v1527
    %v1534 = vtanh.pop %v1530
    %1535 = vst [vmem:[#allocation10] sm:$0xff] %v1533
    %1536 = vst [vmem:[#allocation10 + $0x8] sm:$0xff] %v1534
    // Predicated region
    $region30: #{tpu_custom_call.1} parent=1 // pred_check
      _
    $region31: #{tpu_custom_call.1} parent=1 // pred_check_branch
      %1538 = sbr.rel (0) target = $region33
    $region32: #{tpu_custom_call.1} parent=1 // pred_region
      %s1540 = ssub.s32 256, 256
      %1541 = vsyncadd [#allocation6], %s1540
      %s1542 = sshll.u32 [#allocation10], 4
      %s1543 = int_to_ptr.vmem [resolvable:$true] %s1542
      %1548 = dma.vmem_to_hbm [thread:$0]  %s1543, 256, %s4, [#allocation6], 128, 128, 8
    $region33: #{tpu_custom_call.1} parent=1 // pred_fallthru
      _
    // Predicated region
    $region34: #{tpu_custom_call.1} parent=1 // pred_check
      _
    $region35: #{tpu_custom_call.1} parent=1 // pred_check_branch
      %1550 = sbr.rel (0) target = $region37
    $region36: #{tpu_custom_call.1} parent=1 // pred_region
      %1551 = dma.done [#allocation6], 256
    $region37: #{tpu_custom_call.1} parent=1 // pred_fallthru
      _
    %1552 = vsyncpa [#allocation5], 1
    %1553 = vsyncpa [#allocation8], 1
    %1554 = vsyncpa [#allocation6], 1

</llo_original>
